<compile_context>
chip_gen: v6e
topology: v6e:2x2x1
jax: 0.10.0
libtpu: 0.0.40
codegen_flags: <defaults>
</compile_context>

<pallas_src>
import functools

import jax
import jax.numpy as jnp
from jax.experimental import pallas as pl
from jax.experimental.pallas import tpu as pltpu

# ---- problem sizes (HW3-style dynamics model) ----
B = 256        # batch (multiple of 128 -> lane-dense tiles)
S = 8          # state dim
A = 8          # action dim
H = 32         # hidden dim
N = 4          # number of rollout steps
DISCOUNT = 0.99
LANE = 128     # TPU lane width


def _multi_step_loss_kernel(
    state_ref, actions_ref, targets_ref,
    w1_ref, b1_ref, w2_ref, b2_ref, w3_ref, b3_ref,
    out_ref,
    *, n_steps, discount, true_batch, padded_batch,
):
  """One batch tile: n-step rollout + discounted squared-error accumulation.

  Feature-major / batch-on-lanes layout:
    state_ref  (S, TB)   actions_ref (N, A, TB)   targets_ref (N, S, TB)
    w1_ref (H, S+A)  w2_ref (H, H)  w3_ref (S, H)
    b1_ref (H, 1)    b2_ref (H, 1)  b3_ref (S, 1)
    out_ref (1, TB)  -- per-tile discounted sum of squared errors (S reduced)
  """
  # Hoist all loop-invariant loads out of the unrolled step loop.
  w1 = w1_ref[...]
  b1 = b1_ref[...]
  w2 = w2_ref[...]
  b2 = b2_ref[...]
  w3 = w3_ref[...]
  b3 = b3_ref[...]

  s = state_ref[...].astype(jnp.float32)                     # (S, TB)
  tb = s.shape[1]
  acc = jnp.zeros_like(s)                                    # discounted sum of sq. err

  for i in range(n_steps):                                   # static unroll (N small)
    a = actions_ref[i].astype(jnp.float32)                   # (A, TB)

    # [s, a] stacked on sublanes -> single MXU push for layer 1.
    x = jnp.concatenate([s, a], axis=0)                      # (S+A, TB)
    h = jnp.dot(w1, x, preferred_element_type=jnp.float32) + b1   # (H, TB)
    h = jnp.maximum(h, 0.0)

    h = jnp.dot(w2, h, preferred_element_type=jnp.float32) + b2
    h = jnp.maximum(h, 0.0)

    s = jnp.dot(w3, h, preferred_element_type=jnp.float32) + b3   # (S, TB)

    diff = s - targets_ref[i].astype(jnp.float32)            # (S, TB)
    acc = acc + jnp.float32(discount ** i) * (diff * diff)

  if padded_batch != true_batch:
    # Mask out zero-padded batch lanes (static condition: only emitted if needed).
    lane = jax.lax.broadcasted_iota(jnp.int32, (1, tb), 1)
    global_idx = pl.program_id(0) * tb + lane
    acc = acc * (global_idx < true_batch).astype(jnp.float32)

  # Reduce over the state (sublane) axis in-kernel; store a lane-dense (1, TB) block.
  out_ref[...] = jnp.sum(acc, axis=0, keepdims=True)


def _multi_step_loss_impl(state, actions, target_states, params, discount):
  """state (B,S), actions (B,N,A), target_states (B,N,S); params use PyTorch-style
  (in,out) weights / (1,out) biases. Returns the scalar multi-step loss."""
  w1, b1, w2, b2, w3, b3 = params
  batch, s_dim = state.shape
  n_steps, a_dim = actions.shape[1], actions.shape[2]

  # Pad the batch to a lane-dense multiple of 128.
  padded_batch = ((batch + LANE - 1) // LANE) * LANE
  pad = padded_batch - batch
  if pad:
    state = jnp.pad(state, ((0, pad), (0, 0)))
    actions = jnp.pad(actions, ((0, pad), (0, 0), (0, 0)))
    target_states = jnp.pad(target_states, ((0, pad), (0, 0), (0, 0)))

  # One tile per TensorCore when the padded batch splits into an even number of
  # 128-lane chunks (v7x: 2 TCs); otherwise a single fat tile (v5e/v6e: 1 TC).
  n128 = padded_batch // LANE
  num_tiles = 2 if (n128 >= 2 and n128 % 2 == 0) else 1
  tb = padded_batch // num_tiles

  # Layout plumbing (fused under jit): batch-on-lanes, features on sublanes.
  state_t = state.T                                          # (S, Bp)
  actions_t = jnp.transpose(actions, (1, 2, 0))              # (N, A, Bp)
  targets_t = jnp.transpose(target_states, (1, 2, 0))        # (N, S, Bp)

  w1_t = w1.T                                                # (H, S+A)
  w2_t, w3_t = w2.T, w3.T                                    # (H, H), (S, H)
  b1_t, b2_t, b3_t = b1.T, b2.T, b3.T                        # (H,1), (H,1), (S,1)

  kernel = functools.partial(
      _multi_step_loss_kernel, n_steps=n_steps, discount=discount,
      true_batch=batch, padded_batch=padded_batch)

  def full_spec(arr):
    nd = arr.ndim
    return pl.BlockSpec(arr.shape, lambda b, _nd=nd: (0,) * _nd)

  partial_sums = pl.pallas_call(
      kernel,
      out_shape=jax.ShapeDtypeStruct((num_tiles, 1, tb), jnp.float32),
      grid=(num_tiles,),
      in_specs=[
          pl.BlockSpec((s_dim, tb), lambda b: (0, b)),             # state tile
          pl.BlockSpec((n_steps, a_dim, tb), lambda b: (0, 0, b)), # actions tile
          pl.BlockSpec((n_steps, s_dim, tb), lambda b: (0, 0, b)), # targets tile
          full_spec(w1_t), full_spec(b1_t),
          full_spec(w2_t), full_spec(b2_t),
          full_spec(w3_t), full_spec(b3_t),
      ],
      out_specs=pl.BlockSpec((None, 1, tb), lambda b: (b, 0, 0)),
      compiler_params=pltpu.CompilerParams(
          dimension_semantics=("parallel",)),
  )(state_t, actions_t, targets_t,
    w1_t, b1_t, w2_t, b2_t, w3_t, b3_t)

  # Per-step MSE is a mean over (batch, state); mean is linear, so summing the
  # per-tile discounted SSE and dividing once by B*S matches the module.
  return jnp.sum(partial_sums) / jnp.float32(batch * s_dim)


_multi_step_loss_jit = jax.jit(_multi_step_loss_impl, static_argnums=(4,))


def multi_step_loss(state, actions, target_states, params, discount=DISCOUNT):
  return _multi_step_loss_jit(state, actions, target_states, params, discount)


def _reference_multi_step_loss(state, actions, target_states, params,
                               discount=DISCOUNT):
  """Pure-JAX reference mirroring the PyTorch module."""
  w1, b1, w2, b2, w3, b3 = params
  loss = 0.0
  s = state
  n = actions.shape[1]
  for i in range(n):
    x = jnp.concatenate([s, actions[:, i]], axis=-1)
    h = jax.nn.relu(x @ w1 + b1[0])
    h = jax.nn.relu(h @ w2 + b2[0])
    s = h @ w3 + b3[0]
    loss = loss + (discount ** i) * jnp.mean((s - target_states[:, i]) ** 2)
  return loss


if __name__ == "__main__":
  key = jax.random.PRNGKey(0)
  ks = jax.random.split(key, 9)

  # Deterministic synthetic parameters (MLP dynamics model).
  w1 = jax.random.normal(ks[0], (S + A, H), jnp.float32) * 0.1
  b1 = jax.random.normal(ks[1], (1, H), jnp.float32) * 0.01
  w2 = jax.random.normal(ks[2], (H, H), jnp.float32) * 0.1
  b2 = jax.random.normal(ks[3], (1, H), jnp.float32) * 0.01
  w3 = jax.random.normal(ks[4], (H, S), jnp.float32) * 0.1
  b3 = jax.random.normal(ks[5], (1, S), jnp.float32) * 0.01
  params = (w1, b1, w2, b2, w3, b3)

  # Case 1: lane-dense batch (2 tiles of 128 -> one per v7x TensorCore).
  state = jax.random.normal(ks[6], (B, S), jnp.float32)
  actions = jax.random.normal(ks[7], (B, N, A), jnp.float32)
  target_states = jax.random.normal(ks[8], (B, N, S), jnp.float32)

  loss_kernel = multi_step_loss(state, actions, target_states, params)
  jax.block_until_ready(loss_kernel)
  loss_ref = _reference_multi_step_loss(state, actions, target_states, params)
  assert jnp.allclose(loss_kernel, loss_ref, rtol=1e-4, atol=1e-4), (
      f"mismatch (B={B}): kernel={loss_kernel}, ref={loss_ref}")

  # Case 2: ragged batch (exercises zero-padding + lane masking).
  B2 = 100
  state2 = state[:B2]
  actions2 = actions[:B2]
  target_states2 = target_states[:B2]

  loss_kernel2 = multi_step_loss(state2, actions2, target_states2, params)
  jax.block_until_ready(loss_kernel2)
  loss_ref2 = _reference_multi_step_loss(state2, actions2, target_states2, params)
  assert jnp.allclose(loss_kernel2, loss_ref2, rtol=1e-4, atol=1e-4), (
      f"mismatch (B={B2}): kernel={loss_kernel2}, ref={loss_ref2}")

  print("KERNEL_OK")
</pallas_src>

<mosaic_0001>
module attributes {stable_mosaic.version = 11 : i64} {
  func.func @_multi_step_loss_kernel(%arg0: i32, %arg1: memref<8x128xf32, #tpu.memory_space<vmem>>, %arg2: memref<4x8x128xf32, #tpu.memory_space<vmem>>, %arg3: memref<4x8x128xf32, #tpu.memory_space<vmem>>, %arg4: memref<32x16xf32, #tpu.memory_space<vmem>>, %arg5: memref<32x1xf32, #tpu.memory_space<vmem>>, %arg6: memref<32x32xf32, #tpu.memory_space<vmem>>, %arg7: memref<32x1xf32, #tpu.memory_space<vmem>>, %arg8: memref<8x32xf32, #tpu.memory_space<vmem>>, %arg9: memref<8x1xf32, #tpu.memory_space<vmem>>, %arg10: memref<1x1x128xf32, #tpu.memory_space<vmem>>) attributes {dimension_semantics = [#tpu.dimension_semantics<parallel>], iteration_bounds = array<i64: 2>, scalar_prefetch = 0 : i64, scratch_operands = 0 : i64, tpu.core_type = #tpu.core_type<tc>, window_params = [{transform_indices = @transform_0, window_bounds = array<i64: 8, 128>}, {transform_indices = @transform_1, window_bounds = array<i64: 4, 8, 128>}, {transform_indices = @transform_2, window_bounds = array<i64: 4, 8, 128>}, {pipeline_mode = #tpu.pipeline_mode<synchronous>, transform_indices = @transform_3, window_bounds = array<i64: 32, 16>}, {pipeline_mode = #tpu.pipeline_mode<synchronous>, transform_indices = @transform_4, window_bounds = array<i64: 32, 1>}, {pipeline_mode = #tpu.pipeline_mode<synchronous>, transform_indices = @transform_5, window_bounds = array<i64: 32, 32>}, {pipeline_mode = #tpu.pipeline_mode<synchronous>, transform_indices = @transform_6, window_bounds = array<i64: 32, 1>}, {pipeline_mode = #tpu.pipeline_mode<synchronous>, transform_indices = @transform_7, window_bounds = array<i64: 8, 32>}, {pipeline_mode = #tpu.pipeline_mode<synchronous>, transform_indices = @transform_8, window_bounds = array<i64: 8, 1>}, {transform_indices = @transform_9, window_bounds = array<i64: 1, 1, 128>}]} {
    %c0 = arith.constant 0 : index
    %c0_0 = arith.constant 0 : index
    %0 = vector.load %arg4[%c0, %c0_0] : memref<32x16xf32, #tpu.memory_space<vmem>>, vector<32x16xf32>
    %c0_1 = arith.constant 0 : index
    %c0_2 = arith.constant 0 : index
    %1 = vector.load %arg5[%c0_1, %c0_2] : memref<32x1xf32, #tpu.memory_space<vmem>>, vector<32x1xf32>
    %c0_3 = arith.constant 0 : index
    %c0_4 = arith.constant 0 : index
    %2 = vector.load %arg6[%c0_3, %c0_4] : memref<32x32xf32, #tpu.memory_space<vmem>>, vector<32x32xf32>
    %c0_5 = arith.constant 0 : index
    %c0_6 = arith.constant 0 : index
    %3 = vector.load %arg7[%c0_5, %c0_6] : memref<32x1xf32, #tpu.memory_space<vmem>>, vector<32x1xf32>
    %c0_7 = arith.constant 0 : index
    %c0_8 = arith.constant 0 : index
    %4 = vector.load %arg8[%c0_7, %c0_8] : memref<8x32xf32, #tpu.memory_space<vmem>>, vector<8x32xf32>
    %c0_9 = arith.constant 0 : index
    %c0_10 = arith.constant 0 : index
    %5 = vector.load %arg9[%c0_9, %c0_10] : memref<8x1xf32, #tpu.memory_space<vmem>>, vector<8x1xf32>
    %c0_11 = arith.constant 0 : index
    %c0_12 = arith.constant 0 : index
    %6 = vector.load %arg1[%c0_11, %c0_12] : memref<8x128xf32, #tpu.memory_space<vmem>>, vector<8x128xf32>
    %cst = arith.constant 0.000000e+00 : f32
    %7 = vector.broadcast %cst : f32 to vector<8x128xf32>
    %c0_13 = arith.constant 0 : index
    %c0_14 = arith.constant 0 : index
    %c0_15 = arith.constant 0 : index
    %8 = vector.load %arg2[%c0_13, %c0_14, %c0_15] : memref<4x8x128xf32, #tpu.memory_space<vmem>>, vector<1x8x128xf32>
    %9 = vector.shape_cast %8 : vector<1x8x128xf32> to vector<8x128xf32>
    %10 = tpu.concatenate %6, %9 in 0 : vector<8x128xf32>, vector<8x128xf32> -> vector<16x128xf32>
    %cst_16 = arith.constant dense<0.000000e+00> : vector<32x128xf32>
    %11 = tpu.matmul %0, %10, %cst_16 {dimension_numbers = #tpu.dot_dimension_numbers<[1], [0], [0], [1], [0, 0, 1, 1], [], []>} : vector<32x16xf32>, vector<16x128xf32>, vector<32x128xf32> -> vector<32x128xf32>
    %12 = vector.broadcast %1 : vector<32x1xf32> to vector<32x128xf32>
    %13 = arith.addf %11, %12 : vector<32x128xf32>
    %cst_17 = arith.constant 0.000000e+00 : f32
    %14 = vector.broadcast %cst_17 : f32 to vector<32x128xf32>
    %15 = arith.maximumf %13, %14 : vector<32x128xf32>
    %cst_18 = arith.constant dense<0.000000e+00> : vector<32x128xf32>
    %16 = tpu.matmul %2, %15, %cst_18 {dimension_numbers = #tpu.dot_dimension_numbers<[1], [0], [0], [1], [0, 0, 1, 1], [], []>} : vector<32x32xf32>, vector<32x128xf32>, vector<32x128xf32> -> vector<32x128xf32>
    %17 = vector.broadcast %3 : vector<32x1xf32> to vector<32x128xf32>
    %18 = arith.addf %16, %17 : vector<32x128xf32>
    %cst_19 = arith.constant 0.000000e+00 : f32
    %19 = vector.broadcast %cst_19 : f32 to vector<32x128xf32>
    %20 = arith.maximumf %18, %19 : vector<32x128xf32>
    %cst_20 = arith.constant dense<0.000000e+00> : vector<8x128xf32>
    %21 = tpu.matmul %4, %20, %cst_20 {dimension_numbers = #tpu.dot_dimension_numbers<[1], [0], [0], [1], [0, 0, 1, 1], [], []>} : vector<8x32xf32>, vector<32x128xf32>, vector<8x128xf32> -> vector<8x128xf32>
    %22 = vector.broadcast %5 : vector<8x1xf32> to vector<8x128xf32>
    %23 = arith.addf %21, %22 : vector<8x128xf32>
    %c0_21 = arith.constant 0 : index
    %c0_22 = arith.constant 0 : index
    %c0_23 = arith.constant 0 : index
    %24 = vector.load %arg3[%c0_21, %c0_22, %c0_23] : memref<4x8x128xf32, #tpu.memory_space<vmem>>, vector<1x8x128xf32>
    %25 = vector.shape_cast %24 : vector<1x8x128xf32> to vector<8x128xf32>
    %26 = arith.subf %23, %25 : vector<8x128xf32>
    %27 = arith.mulf %26, %26 : vector<8x128xf32>
    %cst_24 = arith.constant 1.000000e+00 : f32
    %28 = vector.broadcast %cst_24 : f32 to vector<8x128xf32>
    %29 = arith.mulf %28, %27 : vector<8x128xf32>
    %30 = arith.addf %7, %29 : vector<8x128xf32>
    %c1 = arith.constant 1 : index
    %c0_25 = arith.constant 0 : index
    %c0_26 = arith.constant 0 : index
    %31 = vector.load %arg2[%c1, %c0_25, %c0_26] : memref<4x8x128xf32, #tpu.memory_space<vmem>>, vector<1x8x128xf32>
    %32 = vector.shape_cast %31 : vector<1x8x128xf32> to vector<8x128xf32>
    %33 = tpu.concatenate %23, %32 in 0 : vector<8x128xf32>, vector<8x128xf32> -> vector<16x128xf32>
    %cst_27 = arith.constant dense<0.000000e+00> : vector<32x128xf32>
    %34 = tpu.matmul %0, %33, %cst_27 {dimension_numbers = #tpu.dot_dimension_numbers<[1], [0], [0], [1], [0, 0, 1, 1], [], []>} : vector<32x16xf32>, vector<16x128xf32>, vector<32x128xf32> -> vector<32x128xf32>
    %35 = vector.broadcast %1 : vector<32x1xf32> to vector<32x128xf32>
    %36 = arith.addf %34, %35 : vector<32x128xf32>
    %cst_28 = arith.constant 0.000000e+00 : f32
    %37 = vector.broadcast %cst_28 : f32 to vector<32x128xf32>
    %38 = arith.maximumf %36, %37 : vector<32x128xf32>
    %cst_29 = arith.constant dense<0.000000e+00> : vector<32x128xf32>
    %39 = tpu.matmul %2, %38, %cst_29 {dimension_numbers = #tpu.dot_dimension_numbers<[1], [0], [0], [1], [0, 0, 1, 1], [], []>} : vector<32x32xf32>, vector<32x128xf32>, vector<32x128xf32> -> vector<32x128xf32>
    %40 = vector.broadcast %3 : vector<32x1xf32> to vector<32x128xf32>
    %41 = arith.addf %39, %40 : vector<32x128xf32>
    %cst_30 = arith.constant 0.000000e+00 : f32
    %42 = vector.broadcast %cst_30 : f32 to vector<32x128xf32>
    %43 = arith.maximumf %41, %42 : vector<32x128xf32>
    %cst_31 = arith.constant dense<0.000000e+00> : vector<8x128xf32>
    %44 = tpu.matmul %4, %43, %cst_31 {dimension_numbers = #tpu.dot_dimension_numbers<[1], [0], [0], [1], [0, 0, 1, 1], [], []>} : vector<8x32xf32>, vector<32x128xf32>, vector<8x128xf32> -> vector<8x128xf32>
    %45 = vector.broadcast %5 : vector<8x1xf32> to vector<8x128xf32>
    %46 = arith.addf %44, %45 : vector<8x128xf32>
    %c1_32 = arith.constant 1 : index
    %c0_33 = arith.constant 0 : index
    %c0_34 = arith.constant 0 : index
    %47 = vector.load %arg3[%c1_32, %c0_33, %c0_34] : memref<4x8x128xf32, #tpu.memory_space<vmem>>, vector<1x8x128xf32>
    %48 = vector.shape_cast %47 : vector<1x8x128xf32> to vector<8x128xf32>
    %49 = arith.subf %46, %48 : vector<8x128xf32>
    %50 = arith.mulf %49, %49 : vector<8x128xf32>
    %cst_35 = arith.constant 9.900000e-01 : f32
    %51 = vector.broadcast %cst_35 : f32 to vector<8x128xf32>
    %52 = arith.mulf %51, %50 : vector<8x128xf32>
    %53 = arith.addf %30, %52 : vector<8x128xf32>
    %c2 = arith.constant 2 : index
    %c0_36 = arith.constant 0 : index
    %c0_37 = arith.constant 0 : index
    %54 = vector.load %arg2[%c2, %c0_36, %c0_37] : memref<4x8x128xf32, #tpu.memory_space<vmem>>, vector<1x8x128xf32>
    %55 = vector.shape_cast %54 : vector<1x8x128xf32> to vector<8x128xf32>
    %56 = tpu.concatenate %46, %55 in 0 : vector<8x128xf32>, vector<8x128xf32> -> vector<16x128xf32>
    %cst_38 = arith.constant dense<0.000000e+00> : vector<32x128xf32>
    %57 = tpu.matmul %0, %56, %cst_38 {dimension_numbers = #tpu.dot_dimension_numbers<[1], [0], [0], [1], [0, 0, 1, 1], [], []>} : vector<32x16xf32>, vector<16x128xf32>, vector<32x128xf32> -> vector<32x128xf32>
    %58 = vector.broadcast %1 : vector<32x1xf32> to vector<32x128xf32>
    %59 = arith.addf %57, %58 : vector<32x128xf32>
    %cst_39 = arith.constant 0.000000e+00 : f32
    %60 = vector.broadcast %cst_39 : f32 to vector<32x128xf32>
    %61 = arith.maximumf %59, %60 : vector<32x128xf32>
    %cst_40 = arith.constant dense<0.000000e+00> : vector<32x128xf32>
    %62 = tpu.matmul %2, %61, %cst_40 {dimension_numbers = #tpu.dot_dimension_numbers<[1], [0], [0], [1], [0, 0, 1, 1], [], []>} : vector<32x32xf32>, vector<32x128xf32>, vector<32x128xf32> -> vector<32x128xf32>
    %63 = vector.broadcast %3 : vector<32x1xf32> to vector<32x128xf32>
    %64 = arith.addf %62, %63 : vector<32x128xf32>
    %cst_41 = arith.constant 0.000000e+00 : f32
    %65 = vector.broadcast %cst_41 : f32 to vector<32x128xf32>
    %66 = arith.maximumf %64, %65 : vector<32x128xf32>
    %cst_42 = arith.constant dense<0.000000e+00> : vector<8x128xf32>
    %67 = tpu.matmul %4, %66, %cst_42 {dimension_numbers = #tpu.dot_dimension_numbers<[1], [0], [0], [1], [0, 0, 1, 1], [], []>} : vector<8x32xf32>, vector<32x128xf32>, vector<8x128xf32> -> vector<8x128xf32>
    %68 = vector.broadcast %5 : vector<8x1xf32> to vector<8x128xf32>
    %69 = arith.addf %67, %68 : vector<8x128xf32>
    %c2_43 = arith.constant 2 : index
    %c0_44 = arith.constant 0 : index
    %c0_45 = arith.constant 0 : index
    %70 = vector.load %arg3[%c2_43, %c0_44, %c0_45] : memref<4x8x128xf32, #tpu.memory_space<vmem>>, vector<1x8x128xf32>
    %71 = vector.shape_cast %70 : vector<1x8x128xf32> to vector<8x128xf32>
    %72 = arith.subf %69, %71 : vector<8x128xf32>
    %73 = arith.mulf %72, %72 : vector<8x128xf32>
    %cst_46 = arith.constant 0.980099976 : f32
    %74 = vector.broadcast %cst_46 : f32 to vector<8x128xf32>
    %75 = arith.mulf %74, %73 : vector<8x128xf32>
    %76 = arith.addf %53, %75 : vector<8x128xf32>
    %c3 = arith.constant 3 : index
    %c0_47 = arith.constant 0 : index
    %c0_48 = arith.constant 0 : index
    %77 = vector.load %arg2[%c3, %c0_47, %c0_48] : memref<4x8x128xf32, #tpu.memory_space<vmem>>, vector<1x8x128xf32>
    %78 = vector.shape_cast %77 : vector<1x8x128xf32> to vector<8x128xf32>
    %79 = tpu.concatenate %69, %78 in 0 : vector<8x128xf32>, vector<8x128xf32> -> vector<16x128xf32>
    %cst_49 = arith.constant dense<0.000000e+00> : vector<32x128xf32>
    %80 = tpu.matmul %0, %79, %cst_49 {dimension_numbers = #tpu.dot_dimension_numbers<[1], [0], [0], [1], [0, 0, 1, 1], [], []>} : vector<32x16xf32>, vector<16x128xf32>, vector<32x128xf32> -> vector<32x128xf32>
    %81 = vector.broadcast %1 : vector<32x1xf32> to vector<32x128xf32>
    %82 = arith.addf %80, %81 : vector<32x128xf32>
    %cst_50 = arith.constant 0.000000e+00 : f32
    %83 = vector.broadcast %cst_50 : f32 to vector<32x128xf32>
    %84 = arith.maximumf %82, %83 : vector<32x128xf32>
    %cst_51 = arith.constant dense<0.000000e+00> : vector<32x128xf32>
    %85 = tpu.matmul %2, %84, %cst_51 {dimension_numbers = #tpu.dot_dimension_numbers<[1], [0], [0], [1], [0, 0, 1, 1], [], []>} : vector<32x32xf32>, vector<32x128xf32>, vector<32x128xf32> -> vector<32x128xf32>
    %86 = vector.broadcast %3 : vector<32x1xf32> to vector<32x128xf32>
    %87 = arith.addf %85, %86 : vector<32x128xf32>
    %cst_52 = arith.constant 0.000000e+00 : f32
    %88 = vector.broadcast %cst_52 : f32 to vector<32x128xf32>
    %89 = arith.maximumf %87, %88 : vector<32x128xf32>
    %cst_53 = arith.constant dense<0.000000e+00> : vector<8x128xf32>
    %90 = tpu.matmul %4, %89, %cst_53 {dimension_numbers = #tpu.dot_dimension_numbers<[1], [0], [0], [1], [0, 0, 1, 1], [], []>} : vector<8x32xf32>, vector<32x128xf32>, vector<8x128xf32> -> vector<8x128xf32>
    %91 = vector.broadcast %5 : vector<8x1xf32> to vector<8x128xf32>
    %92 = arith.addf %90, %91 : vector<8x128xf32>
    %c3_54 = arith.constant 3 : index
    %c0_55 = arith.constant 0 : index
    %c0_56 = arith.constant 0 : index
    %93 = vector.load %arg3[%c3_54, %c0_55, %c0_56] : memref<4x8x128xf32, #tpu.memory_space<vmem>>, vector<1x8x128xf32>
    %94 = vector.shape_cast %93 : vector<1x8x128xf32> to vector<8x128xf32>
    %95 = arith.subf %92, %94 : vector<8x128xf32>
    %96 = arith.mulf %95, %95 : vector<8x128xf32>
    %cst_57 = arith.constant 9.702990e-01 : f32
    %97 = vector.broadcast %cst_57 : f32 to vector<8x128xf32>
    %98 = arith.mulf %97, %96 : vector<8x128xf32>
    %99 = arith.addf %76, %98 : vector<8x128xf32>
    %cst_58 = arith.constant dense<0.000000e+00> : vector<128xf32>
    %100 = vector.multi_reduction <add>, %99, %cst_58 [0] : vector<8x128xf32> to vector<128xf32>
    %101 = vector.shape_cast %100 : vector<128xf32> to vector<1x128xf32>
    %c0_59 = arith.constant 0 : index
    %c0_60 = arith.constant 0 : index
    %c0_61 = arith.constant 0 : index
    %102 = vector.load %arg10[%c0_59, %c0_60, %c0_61] : memref<1x1x128xf32, #tpu.memory_space<vmem>>, vector<1x1x128xf32>
    %103 = vector.shape_cast %102 : vector<1x1x128xf32> to vector<1x128xf32>
    %104 = vector.shape_cast %101 : vector<1x128xf32> to vector<1x1x128xf32>
    tpu.vector_store %arg10[%c0_59, %c0_60, %c0_61], %104 {strides = array<i32>} : memref<1x1x128xf32, #tpu.memory_space<vmem>>, vector<1x1x128xf32>,
    return
  }
  func.func @transform_0(%arg0: i32) -> (i32, i32) {
    %c0_i32 = arith.constant 0 : i32
    %c0_i32_0 = arith.constant 0 : i32
    return %c0_i32, %arg0 : i32, i32
  }
  func.func @transform_1(%arg0: i32) -> (i32, i32, i32) {
    %c0_i32 = arith.constant 0 : i32
    %c0_i32_0 = arith.constant 0 : i32
    %c0_i32_1 = arith.constant 0 : i32
    return %c0_i32, %c0_i32_0, %arg0 : i32, i32, i32
  }
  func.func @transform_2(%arg0: i32) -> (i32, i32, i32) {
    %c0_i32 = arith.constant 0 : i32
    %c0_i32_0 = arith.constant 0 : i32
    %c0_i32_1 = arith.constant 0 : i32
    return %c0_i32, %c0_i32_0, %arg0 : i32, i32, i32
  }
  func.func @transform_3(%arg0: i32) -> (i32, i32) {
    %c0_i32 = arith.constant 0 : i32
    %c0_i32_0 = arith.constant 0 : i32
    %c0_i32_1 = arith.constant 0 : i32
    return %c0_i32, %c0_i32_0 : i32, i32
  }
  func.func @transform_4(%arg0: i32) -> (i32, i32) {
    %c0_i32 = arith.constant 0 : i32
    %c0_i32_0 = arith.constant 0 : i32
    %c0_i32_1 = arith.constant 0 : i32
    return %c0_i32, %c0_i32_0 : i32, i32
  }
  func.func @transform_5(%arg0: i32) -> (i32, i32) {
    %c0_i32 = arith.constant 0 : i32
    %c0_i32_0 = arith.constant 0 : i32
    %c0_i32_1 = arith.constant 0 : i32
    return %c0_i32, %c0_i32_0 : i32, i32
  }
  func.func @transform_6(%arg0: i32) -> (i32, i32) {
    %c0_i32 = arith.constant 0 : i32
    %c0_i32_0 = arith.constant 0 : i32
    %c0_i32_1 = arith.constant 0 : i32
    return %c0_i32, %c0_i32_0 : i32, i32
  }
  func.func @transform_7(%arg0: i32) -> (i32, i32) {
    %c0_i32 = arith.constant 0 : i32
    %c0_i32_0 = arith.constant 0 : i32
    %c0_i32_1 = arith.constant 0 : i32
    return %c0_i32, %c0_i32_0 : i32, i32
  }
  func.func @transform_8(%arg0: i32) -> (i32, i32) {
    %c0_i32 = arith.constant 0 : i32
    %c0_i32_0 = arith.constant 0 : i32
    %c0_i32_1 = arith.constant 0 : i32
    return %c0_i32, %c0_i32_0 : i32, i32
  }
  func.func @transform_9(%arg0: i32) -> (i32, i32, i32) {
    %c0_i32 = arith.constant 0 : i32
    %c0_i32_0 = arith.constant 0 : i32
    %c0_i32_1 = arith.constant 0 : i32
    return %arg0, %c0_i32, %c0_i32_0 : i32, i32, i32
  }
}

</mosaic_0001>

<llo_original>
// kernel: _multi_step_loss_impl.1
$region0: #{_multi_step_loss_impl.1}
  #allocation0 [shape = 'u32[]', space=smem, size = 0x4, offset = 0x4, fixed_abs, tag = 'smem constant byte address 0x4 - core index']
  #allocation1 [shape = 'u32[144,128]{1,0:T(1,128)}', space=vmem, size = 0x12000, scoped, tag = 'internal scratch']
  %s0 = inlined_call_operand.vmem [shape: f32[8,256], index: 0, kind: input, shape index: {}]
  %s1 = inlined_call_operand.vmem [shape: f32[4,8,256], index: 1, kind: input, shape index: {}]
  %s2 = inlined_call_operand.vmem [shape: f32[4,8,256], index: 2, kind: input, shape index: {}]
  %s3 = inlined_call_operand.vmem [shape: f32[32,16], index: 3, kind: input, shape index: {}]
  %s4 = inlined_call_operand.vmem [shape: f32[32,1], index: 4, kind: input, shape index: {}]
  %s5 = inlined_call_operand.vmem [shape: f32[32,32], index: 5, kind: input, shape index: {}]
  %s6 = inlined_call_operand.vmem [shape: f32[32,1], index: 6, kind: input, shape index: {}]
  %s7 = inlined_call_operand.vmem [shape: f32[8,32], index: 7, kind: input, shape index: {}]
  %s8 = inlined_call_operand.vmem [shape: f32[8,1], index: 8, kind: input, shape index: {}]
  %s9 = inlined_call_operand.vmem [shape: f32[2,1,128], index: 9, kind: output, shape index: {}]
  %s10 = sld [smem:[#allocation0]]
  $region145: #{_multi_step_loss_impl.1} parent=0
    _
  %s12 = ssub.s32 1, %s10
  %s13 = scalar_select 0, %s12, %s10
  $region1: #{_multi_step_loss_impl.1} parent=0
    #allocation2 [shape = 'u8[32768]{0}', space=vmem, size = 0x8000, scoped, tag = 'input window, operand 1']
    #allocation3 [shape = 'u8[32768]{0}', space=vmem, size = 0x8000, scoped, tag = 'input window, operand 2']
    loop: start=0, step=1, limit=4
    $region2: #{_multi_step_loss_impl.1} parent=1 // loop_pre_header
      _
    $region3: #{_multi_step_loss_impl.1} parent=1 // loop_header
      %s15 = sphi 0, %s19
      %p16 = scmp.ge.s32.totalorder %s15, 4
      %s25 = sphi 0, %s27
      %s28 = sphi 0, %s25
      %s29 = sphi 0, %s28
      %s45 = sphi 0, %s29
      %s51 = sphi 0, %s53
      %s54 = sphi 0, %s51
      %s55 = sphi 0, %s54
      %s71 = sphi 0, %s55
      %s77 = sphi 0, %s79
      %s80 = sphi 0, %s77
      %s81 = sphi 0, %s80
      %s97 = sphi 0, %s81
      %s101 = sphi 0, %s101
      %s103 = sphi 0, %s101
      %s104 = sphi 0, %s103
      %s118 = sphi 0, %s104
      %s122 = sphi 0, %s122
      %s124 = sphi 0, %s122
      %s125 = sphi 0, %s124
      %s139 = sphi 0, %s125
      %s143 = sphi 0, %s143
      %s145 = sphi 0, %s143
      %s146 = sphi 0, %s145
      %s160 = sphi 0, %s146
      %s164 = sphi 0, %s164
      %s166 = sphi 0, %s164
      %s167 = sphi 0, %s166
      %s181 = sphi 0, %s167
      %s185 = sphi 0, %s185
      %s187 = sphi 0, %s185
      %s188 = sphi 0, %s187
      %s202 = sphi 0, %s188
      %s206 = sphi 0, %s206
      %s208 = sphi 0, %s206
      %s209 = sphi 0, %s208
      %s223 = sphi 0, %s209
      %s229 = sphi 0, %s231
      %s232 = sphi 0, %s229
      %s233 = sphi 0, %s232
      %s249 = sphi 0, %s233
    $region4: #{_multi_step_loss_impl.1} parent=1 // loop_header_branch
      %18 = sbr.rel (%p16) target = $region8
    $region5: #{_multi_step_loss_impl.1} parent=1 // loop_body
      %s20 = ssub.s32 %s15, 1
      %s21 = ssub.s32 %s15, 2
      %s22 = sadd.s32 %s15, 1
      %s23 = ssub.s32 %s15, %s22
      %p24 = scmp.eq.s32.totalorder %s23, 0
      %s26 = sadd.s32 %s25, 1
      %s27 = scalar_select %p24, %s25, %s26
      %p30 = pneg %p24
      %p31 = scmp.eq.s32.totalorder %s15, 1
      %p32 = por %p30, %p31
      %p33 = scmp.ne.s32.totalorder %s25, %s28
      %p34 = scmp.eq.s32.totalorder %s15, 0
      %p35 = por %p33, %p34
      %p36 = scmp.ne.s32.totalorder %s25, %s28
      %p37 = scmp.eq.s32.totalorder %s20, 1
      %p38 = por %p36, %p37
      %p39 = scmp.ne.s32.totalorder %s28, %s29
      %p40 = scmp.eq.s32.totalorder %s20, 0
      %p41 = por %p39, %p40
      %p42 = scmp.ne.s32.totalorder %s28, %s29
      %p43 = scmp.eq.s32.totalorder %s21, 1
      %p44 = por %p42, %p43
      %p46 = scmp.ne.s32.totalorder %s29, %s45
      %p47 = scmp.eq.s32.totalorder %s21, 0
      %p48 = por %p46, %p47
      %s49 = ssub.s32 %s15, %s22
      %p50 = scmp.eq.s32.totalorder %s49, 0
      %s52 = sadd.s32 %s51, 1
      %s53 = scalar_select %p50, %s51, %s52
      %p56 = pneg %p50
      %p57 = scmp.eq.s32.totalorder %s15, 1
      %p58 = por %p56, %p57
      %p59 = scmp.ne.s32.totalorder %s51, %s54
      %p60 = scmp.eq.s32.totalorder %s15, 0
      %p61 = por %p59, %p60
      %p62 = scmp.ne.s32.totalorder %s51, %s54
      %p63 = scmp.eq.s32.totalorder %s20, 1
      %p64 = por %p62, %p63
      %p65 = scmp.ne.s32.totalorder %s54, %s55
      %p66 = scmp.eq.s32.totalorder %s20, 0
      %p67 = por %p65, %p66
      %p68 = scmp.ne.s32.totalorder %s54, %s55
      %p69 = scmp.eq.s32.totalorder %s21, 1
      %p70 = por %p68, %p69
      %p72 = scmp.ne.s32.totalorder %s55, %s71
      %p73 = scmp.eq.s32.totalorder %s21, 0
      %p74 = por %p72, %p73
      %s75 = ssub.s32 %s15, %s22
      %p76 = scmp.eq.s32.totalorder %s75, 0
      %s78 = sadd.s32 %s77, 1
      %s79 = scalar_select %p76, %s77, %s78
      %p82 = pneg %p76
      %p83 = scmp.eq.s32.totalorder %s15, 1
      %p84 = por %p82, %p83
      %p85 = scmp.ne.s32.totalorder %s77, %s80
      %p86 = scmp.eq.s32.totalorder %s15, 0
      %p87 = por %p85, %p86
      %p88 = scmp.ne.s32.totalorder %s77, %s80
      %p89 = scmp.eq.s32.totalorder %s20, 1
      %p90 = por %p88, %p89
      %p91 = scmp.ne.s32.totalorder %s80, %s81
      %p92 = scmp.eq.s32.totalorder %s20, 0
      %p93 = por %p91, %p92
      %p94 = scmp.ne.s32.totalorder %s80, %s81
      %p95 = scmp.eq.s32.totalorder %s21, 1
      %p96 = por %p94, %p95
      %p98 = scmp.ne.s32.totalorder %s81, %s97
      %p99 = scmp.eq.s32.totalorder %s21, 0
      %p100 = por %p98, %p99
      %s102 = sadd.s32 %s101, 1
      %p105 = scmp.eq.s32.totalorder %s15, 1
      %p106 = scmp.ne.s32.totalorder %s101, %s103
      %p107 = scmp.eq.s32.totalorder %s15, 0
      %p108 = por %p106, %p107
      %p109 = scmp.ne.s32.totalorder %s101, %s103
      %p110 = scmp.eq.s32.totalorder %s20, 1
      %p111 = por %p109, %p110
      %p112 = scmp.ne.s32.totalorder %s103, %s104
      %p113 = scmp.eq.s32.totalorder %s20, 0
      %p114 = por %p112, %p113
      %p115 = scmp.ne.s32.totalorder %s103, %s104
      %p116 = scmp.eq.s32.totalorder %s21, 1
      %p117 = por %p115, %p116
      %p119 = scmp.ne.s32.totalorder %s104, %s118
      %p120 = scmp.eq.s32.totalorder %s21, 0
      %p121 = por %p119, %p120
      %s123 = sadd.s32 %s122, 1
      %p126 = scmp.eq.s32.totalorder %s15, 1
      %p127 = scmp.ne.s32.totalorder %s122, %s124
      %p128 = scmp.eq.s32.totalorder %s15, 0
      %p129 = por %p127, %p128
      %p130 = scmp.ne.s32.totalorder %s122, %s124
      %p131 = scmp.eq.s32.totalorder %s20, 1
      %p132 = por %p130, %p131
      %p133 = scmp.ne.s32.totalorder %s124, %s125
      %p134 = scmp.eq.s32.totalorder %s20, 0
      %p135 = por %p133, %p134
      %p136 = scmp.ne.s32.totalorder %s124, %s125
      %p137 = scmp.eq.s32.totalorder %s21, 1
      %p138 = por %p136, %p137
      %p140 = scmp.ne.s32.totalorder %s125, %s139
      %p141 = scmp.eq.s32.totalorder %s21, 0
      %p142 = por %p140, %p141
      %s144 = sadd.s32 %s143, 1
      %p147 = scmp.eq.s32.totalorder %s15, 1
      %p148 = scmp.ne.s32.totalorder %s143, %s145
      %p149 = scmp.eq.s32.totalorder %s15, 0
      %p150 = por %p148, %p149
      %p151 = scmp.ne.s32.totalorder %s143, %s145
      %p152 = scmp.eq.s32.totalorder %s20, 1
      %p153 = por %p151, %p152
      %p154 = scmp.ne.s32.totalorder %s145, %s146
      %p155 = scmp.eq.s32.totalorder %s20, 0
      %p156 = por %p154, %p155
      %p157 = scmp.ne.s32.totalorder %s145, %s146
      %p158 = scmp.eq.s32.totalorder %s21, 1
      %p159 = por %p157, %p158
      %p161 = scmp.ne.s32.totalorder %s146, %s160
      %p162 = scmp.eq.s32.totalorder %s21, 0
      %p163 = por %p161, %p162
      %s165 = sadd.s32 %s164, 1
      %p168 = scmp.eq.s32.totalorder %s15, 1
      %p169 = scmp.ne.s32.totalorder %s164, %s166
      %p170 = scmp.eq.s32.totalorder %s15, 0
      %p171 = por %p169, %p170
      %p172 = scmp.ne.s32.totalorder %s164, %s166
      %p173 = scmp.eq.s32.totalorder %s20, 1
      %p174 = por %p172, %p173
      %p175 = scmp.ne.s32.totalorder %s166, %s167
      %p176 = scmp.eq.s32.totalorder %s20, 0
      %p177 = por %p175, %p176
      %p178 = scmp.ne.s32.totalorder %s166, %s167
      %p179 = scmp.eq.s32.totalorder %s21, 1
      %p180 = por %p178, %p179
      %p182 = scmp.ne.s32.totalorder %s167, %s181
      %p183 = scmp.eq.s32.totalorder %s21, 0
      %p184 = por %p182, %p183
      %s186 = sadd.s32 %s185, 1
      %p189 = scmp.eq.s32.totalorder %s15, 1
      %p190 = scmp.ne.s32.totalorder %s185, %s187
      %p191 = scmp.eq.s32.totalorder %s15, 0
      %p192 = por %p190, %p191
      %p193 = scmp.ne.s32.totalorder %s185, %s187
      %p194 = scmp.eq.s32.totalorder %s20, 1
      %p195 = por %p193, %p194
      %p196 = scmp.ne.s32.totalorder %s187, %s188
      %p197 = scmp.eq.s32.totalorder %s20, 0
      %p198 = por %p196, %p197
      %p199 = scmp.ne.s32.totalorder %s187, %s188
      %p200 = scmp.eq.s32.totalorder %s21, 1
      %p201 = por %p199, %p200
      %p203 = scmp.ne.s32.totalorder %s188, %s202
      %p204 = scmp.eq.s32.totalorder %s21, 0
      %p205 = por %p203, %p204
      %s207 = sadd.s32 %s206, 1
      %p210 = scmp.eq.s32.totalorder %s15, 1
      %p211 = scmp.ne.s32.totalorder %s206, %s208
      %p212 = scmp.eq.s32.totalorder %s15, 0
      %p213 = por %p211, %p212
      %p214 = scmp.ne.s32.totalorder %s206, %s208
      %p215 = scmp.eq.s32.totalorder %s20, 1
      %p216 = por %p214, %p215
      %p217 = scmp.ne.s32.totalorder %s208, %s209
      %p218 = scmp.eq.s32.totalorder %s20, 0
      %p219 = por %p217, %p218
      %p220 = scmp.ne.s32.totalorder %s208, %s209
      %p221 = scmp.eq.s32.totalorder %s21, 1
      %p222 = por %p220, %p221
      %p224 = scmp.ne.s32.totalorder %s209, %s223
      %p225 = scmp.eq.s32.totalorder %s21, 0
      %p226 = por %p224, %p225
      %s227 = ssub.s32 %s15, %s22
      %p228 = scmp.eq.s32.totalorder %s227, 0
      %s230 = sadd.s32 %s229, 1
      %s231 = scalar_select %p228, %s229, %s230
      %p234 = pneg %p228
      %p235 = scmp.eq.s32.totalorder %s15, 1
      %p236 = por %p234, %p235
      %p237 = scmp.ne.s32.totalorder %s229, %s232
      %p238 = scmp.eq.s32.totalorder %s15, 0
      %p239 = por %p237, %p238
      %p240 = scmp.ne.s32.totalorder %s229, %s232
      %p241 = scmp.eq.s32.totalorder %s20, 1
      %p242 = por %p240, %p241
      %p243 = scmp.ne.s32.totalorder %s232, %s233
      %p244 = scmp.eq.s32.totalorder %s20, 0
      %p245 = por %p243, %p244
      %p246 = scmp.ne.s32.totalorder %s232, %s233
      %p247 = scmp.eq.s32.totalorder %s21, 1
      %p248 = por %p246, %p247
      %p250 = scmp.ne.s32.totalorder %s233, %s249
      %p251 = scmp.eq.s32.totalorder %s21, 0
      %p252 = por %p250, %p251
      %p253 = scmp.le.s32.totalorder 1, %s15
      %p254 = scmp.lt.s32.totalorder %s15, 3
      %p255 = pnand %p253, %p254
      %p256 = pneg %p255
      // Predicated region
      $region9: #{_multi_step_loss_impl.1} parent=5 // pred_check
        _
      $region10: #{_multi_step_loss_impl.1} parent=5 // pred_check_branch
        %258 = sbr.rel (%p255) target = $region12
      $region11: #{_multi_step_loss_impl.1} parent=5 // pred_region
        %s259 = ssub.s32 %s15, 1
        // Predicated region
        $region13: #{_multi_step_loss_impl.1} parent=11 // pred_check
          %p260 = pneg %p114
        $region14: #{_multi_step_loss_impl.1} parent=11 // pred_check_branch
          %262 = sbr.rel (%p260) target = $region16
        $region15: #{_multi_step_loss_impl.1} parent=11 // pred_region
          _
        $region16: #{_multi_step_loss_impl.1} parent=11 // pred_fallthru
          _
        // Predicated region
        $region17: #{_multi_step_loss_impl.1} parent=11 // pred_check
          %p263 = pneg %p135
        $region18: #{_multi_step_loss_impl.1} parent=11 // pred_check_branch
          %265 = sbr.rel (%p263) target = $region20
        $region19: #{_multi_step_loss_impl.1} parent=11 // pred_region
          _
        $region20: #{_multi_step_loss_impl.1} parent=11 // pred_fallthru
          _
        // Predicated region
        $region21: #{_multi_step_loss_impl.1} parent=11 // pred_check
          %p266 = pneg %p156
        $region22: #{_multi_step_loss_impl.1} parent=11 // pred_check_branch
          %268 = sbr.rel (%p266) target = $region24
        $region23: #{_multi_step_loss_impl.1} parent=11 // pred_region
          _
        $region24: #{_multi_step_loss_impl.1} parent=11 // pred_fallthru
          _
        // Predicated region
        $region25: #{_multi_step_loss_impl.1} parent=11 // pred_check
          %p269 = pneg %p177
        $region26: #{_multi_step_loss_impl.1} parent=11 // pred_check_branch
          %271 = sbr.rel (%p269) target = $region28
        $region27: #{_multi_step_loss_impl.1} parent=11 // pred_region
          _
        $region28: #{_multi_step_loss_impl.1} parent=11 // pred_fallthru
          _
        // Predicated region
        $region29: #{_multi_step_loss_impl.1} parent=11 // pred_check
          %p272 = pneg %p198
        $region30: #{_multi_step_loss_impl.1} parent=11 // pred_check_branch
          %274 = sbr.rel (%p272) target = $region32
        $region31: #{_multi_step_loss_impl.1} parent=11 // pred_region
          _
        $region32: #{_multi_step_loss_impl.1} parent=11 // pred_fallthru
          _
        // Predicated region
        $region33: #{_multi_step_loss_impl.1} parent=11 // pred_check
          %p275 = pneg %p219
        $region34: #{_multi_step_loss_impl.1} parent=11 // pred_check_branch
          %277 = sbr.rel (%p275) target = $region36
        $region35: #{_multi_step_loss_impl.1} parent=11 // pred_region
          _
        $region36: #{_multi_step_loss_impl.1} parent=11 // pred_fallthru
          _
      $region12: #{_multi_step_loss_impl.1} parent=5 // pred_fallthru
        _
      %p278 = scmp.lt.s32.totalorder %s15, 2
      // Predicated region
      $region37: #{_multi_step_loss_impl.1} parent=5 // pred_check
        %p279 = pneg %p278
      $region38: #{_multi_step_loss_impl.1} parent=5 // pred_check_branch
        %281 = sbr.rel (%p279) target = $region40
      $region39: #{_multi_step_loss_impl.1} parent=5 // pred_region
        // Predicated region
        $region41: #{_multi_step_loss_impl.1} parent=39 // pred_check
          %p282 = pneg %p35
        $region42: #{_multi_step_loss_impl.1} parent=39 // pred_check_branch
          %284 = sbr.rel (%p282) target = $region44
        $region43: #{_multi_step_loss_impl.1} parent=39 // pred_region
          %p285 = scmp.lt.s32.totalorder %s15, 1
          %s286 = scalar_select %p285, %s15, 1
          %s287 = smul.addr %s286, 8
          %s288 = scalar_lea.vmem %s0, %s287
        $region44: #{_multi_step_loss_impl.1} parent=39 // pred_fallthru
          _
        // Predicated region
        $region45: #{_multi_step_loss_impl.1} parent=39 // pred_check
          %p289 = pneg %p61
        $region46: #{_multi_step_loss_impl.1} parent=39 // pred_check_branch
          %291 = sbr.rel (%p289) target = $region48
        $region47: #{_multi_step_loss_impl.1} parent=39 // pred_region
          %s292 = sand.u32 %s51, 1
          %s293 = sand.u32 %s51, 1
          %s294 = smul.addr %s293, 32
          %s295 = scalar_lea.vmem [#allocation2], %s294
          %s296 = smul.addr %s15, 8
          %s297 = scalar_lea.vmem %s1, %s296
          // Predicated region
          $region49: #{_multi_step_loss_impl.1} parent=47 // pred_check
            _
          $region50: #{_multi_step_loss_impl.1} parent=47 // pred_check_branch
            %299 = sbr.rel (0) target = $region52
          $region51: #{_multi_step_loss_impl.1} parent=47 // pred_region
            // Predicated region
            $region53: #{_multi_step_loss_impl.1} parent=51 // pred_check
              _
            $region54: #{_multi_step_loss_impl.1} parent=51 // pred_check_branch
              %301 = sbr.rel (0) target = $region56
            $region55: #{_multi_step_loss_impl.1} parent=51 // pred_region
              // Predicated region
              $region68: #{_multi_step_loss_impl.1} parent=55 // pred_check
                _
              $region69: #{_multi_step_loss_impl.1} parent=55 // pred_check_branch
                %323 = sbr.rel (0) target = $region71
              $region70: #{_multi_step_loss_impl.1} parent=55 // pred_region
                loop: start=0, step=1, limit=1
                $region72: #{_multi_step_loss_impl.1} parent=70 // loop_pre_header
                  _
                $region73: #{_multi_step_loss_impl.1} parent=70 // loop_header
                  %s325 = sphi 0, %s329
                  %p326 = scmp.ge.s32.totalorder %s325, 1
                  %s330 = sphi %s297, %s297
                  %s331 = sphi %s295, %s295
                $region74: #{_multi_step_loss_impl.1} parent=70 // loop_header_branch
                  %328 = sbr.rel (%p326) target = $region78
                $region75: #{_multi_step_loss_impl.1} parent=70 // loop_body
                  %v332 = vld [vmem:[%s330] sm:$0xff]
                  %333 = vst [vmem:[%s331] sm:$0xff] %v332
                  %v334 = vld [vmem:[%s330 + $0x10] sm:$0xff]
                  %335 = vst [vmem:[%s331 + $0x8] sm:$0xff] %v334
                  %v336 = vld [vmem:[%s330 + $0x20] sm:$0xff]
                  %337 = vst [vmem:[%s331 + $0x10] sm:$0xff] %v336
                  %v338 = vld [vmem:[%s330 + $0x30] sm:$0xff]
                  %339 = vst [vmem:[%s331 + $0x18] sm:$0xff] %v338
                $region76: #{_multi_step_loss_impl.1} parent=70 // loop_footer
                  %s329 = sadd.s32 1, %s325
                $region77: #{_multi_step_loss_impl.1} parent=70 // loop_footer_branch
                  %324 = sbr.rel target = $region73
                $region78: #{_multi_step_loss_impl.1} parent=70 // loop_exit
                  _
              $region71: #{_multi_step_loss_impl.1} parent=55 // pred_fallthru
                _
              // Predicated region
              $region79: #{_multi_step_loss_impl.1} parent=55 // pred_check
                _
              $region80: #{_multi_step_loss_impl.1} parent=55 // pred_check_branch
                %341 = sbr.rel target = $region82
              $region81: #{_multi_step_loss_impl.1} parent=55 // pred_region
                _
              $region82: #{_multi_step_loss_impl.1} parent=55 // pred_fallthru
                _
            $region56: #{_multi_step_loss_impl.1} parent=51 // pred_fallthru
              _
            // Predicated region
            $region57: #{_multi_step_loss_impl.1} parent=51 // pred_check
              _
            $region58: #{_multi_step_loss_impl.1} parent=51 // pred_check_branch
              %303 = sbr.rel target = $region60
            $region59: #{_multi_step_loss_impl.1} parent=51 // pred_region
              %s305 = ssub.s32 256, 1
              loop: start=0, step=1, limit=1
              $region61: #{_multi_step_loss_impl.1} parent=59 // loop_pre_header
                _
              $region62: #{_multi_step_loss_impl.1} parent=59 // loop_header
                %s307 = sphi 0, %s311
                %p308 = scmp.ge.s32.totalorder %s307, 1
                %s312 = sphi %s297, %s297
                %s313 = sphi %s295, %s295
              $region63: #{_multi_step_loss_impl.1} parent=59 // loop_header_branch
                %310 = sbr.rel (%p308) target = $region67
              $region64: #{_multi_step_loss_impl.1} parent=59 // loop_body
                %v314 = vld [vmem:[%s312] sm:%s305]
                %315 = vst [vmem:[%s313] sm:%s305] %v314
                %v316 = vld [vmem:[%s312 + $0x10] sm:%s305]
                %317 = vst [vmem:[%s313 + $0x8] sm:%s305] %v316
                %v318 = vld [vmem:[%s312 + $0x20] sm:%s305]
                %319 = vst [vmem:[%s313 + $0x10] sm:%s305] %v318
                %v320 = vld [vmem:[%s312 + $0x30] sm:%s305]
                %321 = vst [vmem:[%s313 + $0x18] sm:%s305] %v320
              $region65: #{_multi_step_loss_impl.1} parent=59 // loop_footer
                %s311 = sadd.s32 1, %s307
              $region66: #{_multi_step_loss_impl.1} parent=59 // loop_footer_branch
                %306 = sbr.rel target = $region62
              $region67: #{_multi_step_loss_impl.1} parent=59 // loop_exit
                _
            $region60: #{_multi_step_loss_impl.1} parent=51 // pred_fallthru
              _
          $region52: #{_multi_step_loss_impl.1} parent=47 // pred_fallthru
            _
          %342 = vnop
        $region48: #{_multi_step_loss_impl.1} parent=39 // pred_fallthru
          _
        // Predicated region
        $region83: #{_multi_step_loss_impl.1} parent=39 // pred_check
          %p343 = pneg %p87
        $region84: #{_multi_step_loss_impl.1} parent=39 // pred_check_branch
          %345 = sbr.rel (%p343) target = $region86
        $region85: #{_multi_step_loss_impl.1} parent=39 // pred_region
          %s346 = sand.u32 %s77, 1
          %s347 = sand.u32 %s77, 1
          %s348 = smul.addr %s347, 32
          %s349 = scalar_lea.vmem [#allocation3], %s348
          %s350 = smul.addr %s15, 8
          %s351 = scalar_lea.vmem %s2, %s350
          // Predicated region
          $region87: #{_multi_step_loss_impl.1} parent=85 // pred_check
            _
          $region88: #{_multi_step_loss_impl.1} parent=85 // pred_check_branch
            %353 = sbr.rel (0) target = $region90
          $region89: #{_multi_step_loss_impl.1} parent=85 // pred_region
            // Predicated region
            $region91: #{_multi_step_loss_impl.1} parent=89 // pred_check
              _
            $region92: #{_multi_step_loss_impl.1} parent=89 // pred_check_branch
              %355 = sbr.rel (0) target = $region94
            $region93: #{_multi_step_loss_impl.1} parent=89 // pred_region
              // Predicated region
              $region106: #{_multi_step_loss_impl.1} parent=93 // pred_check
                _
              $region107: #{_multi_step_loss_impl.1} parent=93 // pred_check_branch
                %377 = sbr.rel (0) target = $region109
              $region108: #{_multi_step_loss_impl.1} parent=93 // pred_region
                loop: start=0, step=1, limit=1
                $region110: #{_multi_step_loss_impl.1} parent=108 // loop_pre_header
                  _
                $region111: #{_multi_step_loss_impl.1} parent=108 // loop_header
                  %s379 = sphi 0, %s383
                  %p380 = scmp.ge.s32.totalorder %s379, 1
                  %s384 = sphi %s351, %s351
                  %s385 = sphi %s349, %s349
                $region112: #{_multi_step_loss_impl.1} parent=108 // loop_header_branch
                  %382 = sbr.rel (%p380) target = $region116
                $region113: #{_multi_step_loss_impl.1} parent=108 // loop_body
                  %v386 = vld [vmem:[%s384] sm:$0xff]
                  %387 = vst [vmem:[%s385] sm:$0xff] %v386
                  %v388 = vld [vmem:[%s384 + $0x10] sm:$0xff]
                  %389 = vst [vmem:[%s385 + $0x8] sm:$0xff] %v388
                  %v390 = vld [vmem:[%s384 + $0x20] sm:$0xff]
                  %391 = vst [vmem:[%s385 + $0x10] sm:$0xff] %v390
                  %v392 = vld [vmem:[%s384 + $0x30] sm:$0xff]
                  %393 = vst [vmem:[%s385 + $0x18] sm:$0xff] %v392
                $region114: #{_multi_step_loss_impl.1} parent=108 // loop_footer
                  %s383 = sadd.s32 1, %s379
                $region115: #{_multi_step_loss_impl.1} parent=108 // loop_footer_branch
                  %378 = sbr.rel target = $region111
                $region116: #{_multi_step_loss_impl.1} parent=108 // loop_exit
                  _
              $region109: #{_multi_step_loss_impl.1} parent=93 // pred_fallthru
                _
              // Predicated region
              $region117: #{_multi_step_loss_impl.1} parent=93 // pred_check
                _
              $region118: #{_multi_step_loss_impl.1} parent=93 // pred_check_branch
                %395 = sbr.rel target = $region120
              $region119: #{_multi_step_loss_impl.1} parent=93 // pred_region
                _
              $region120: #{_multi_step_loss_impl.1} parent=93 // pred_fallthru
                _
            $region94: #{_multi_step_loss_impl.1} parent=89 // pred_fallthru
              _
            // Predicated region
            $region95: #{_multi_step_loss_impl.1} parent=89 // pred_check
              _
            $region96: #{_multi_step_loss_impl.1} parent=89 // pred_check_branch
              %357 = sbr.rel target = $region98
            $region97: #{_multi_step_loss_impl.1} parent=89 // pred_region
              %s359 = ssub.s32 256, 1
              loop: start=0, step=1, limit=1
              $region99: #{_multi_step_loss_impl.1} parent=97 // loop_pre_header
                _
              $region100: #{_multi_step_loss_impl.1} parent=97 // loop_header
                %s361 = sphi 0, %s365
                %p362 = scmp.ge.s32.totalorder %s361, 1
                %s366 = sphi %s351, %s351
                %s367 = sphi %s349, %s349
              $region101: #{_multi_step_loss_impl.1} parent=97 // loop_header_branch
                %364 = sbr.rel (%p362) target = $region105
              $region102: #{_multi_step_loss_impl.1} parent=97 // loop_body
                %v368 = vld [vmem:[%s366] sm:%s359]
                %369 = vst [vmem:[%s367] sm:%s359] %v368
                %v370 = vld [vmem:[%s366 + $0x10] sm:%s359]
                %371 = vst [vmem:[%s367 + $0x8] sm:%s359] %v370
                %v372 = vld [vmem:[%s366 + $0x20] sm:%s359]
                %373 = vst [vmem:[%s367 + $0x10] sm:%s359] %v372
                %v374 = vld [vmem:[%s366 + $0x30] sm:%s359]
                %375 = vst [vmem:[%s367 + $0x18] sm:%s359] %v374
              $region103: #{_multi_step_loss_impl.1} parent=97 // loop_footer
                %s365 = sadd.s32 1, %s361
              $region104: #{_multi_step_loss_impl.1} parent=97 // loop_footer_branch
                %360 = sbr.rel target = $region100
              $region105: #{_multi_step_loss_impl.1} parent=97 // loop_exit
                _
            $region98: #{_multi_step_loss_impl.1} parent=89 // pred_fallthru
              _
          $region90: #{_multi_step_loss_impl.1} parent=85 // pred_fallthru
            _
          %396 = vnop
        $region86: #{_multi_step_loss_impl.1} parent=39 // pred_fallthru
          _
      $region40: #{_multi_step_loss_impl.1} parent=5 // pred_fallthru
        _
      %p397 = scmp.le.s32.totalorder 1, %s15
      %p398 = scmp.lt.s32.totalorder %s15, 3
      %p399 = pnand %p397, %p398
      %p400 = pneg %p399
      // Predicated region
      $region121: #{_multi_step_loss_impl.1} parent=5 // pred_check
        _
      $region122: #{_multi_step_loss_impl.1} parent=5 // pred_check_branch
        %402 = sbr.rel (%p399) target = $region124
      $region123: #{_multi_step_loss_impl.1} parent=5 // pred_region
        %s403 = ssub.s32 %s15, 1
        %s404 = sand.u32 %s54, 1
        %s405 = sand.u32 %s54, 1
        %s406 = smul.addr %s405, 32
        %s407 = scalar_lea.vmem [#allocation2], %s406
        // Predicated region
        $region125: #{_multi_step_loss_impl.1} parent=123 // pred_check
          %p408 = pneg %p67
        $region126: #{_multi_step_loss_impl.1} parent=123 // pred_check_branch
          %410 = sbr.rel (%p408) target = $region128
        $region127: #{_multi_step_loss_impl.1} parent=123 // pred_region
          _
        $region128: #{_multi_step_loss_impl.1} parent=123 // pred_fallthru
          _
        %s411 = sand.u32 %s80, 1
        %s412 = sand.u32 %s80, 1
        %s413 = smul.addr %s412, 32
        %s414 = scalar_lea.vmem [#allocation3], %s413
        // Predicated region
        $region129: #{_multi_step_loss_impl.1} parent=123 // pred_check
          %p415 = pneg %p93
        $region130: #{_multi_step_loss_impl.1} parent=123 // pred_check_branch
          %417 = sbr.rel (%p415) target = $region132
        $region131: #{_multi_step_loss_impl.1} parent=123 // pred_region
          _
        $region132: #{_multi_step_loss_impl.1} parent=123 // pred_fallthru
          _
        %p418 = scmp.lt.s32.totalorder %s20, 1
        %s419 = scalar_select %p418, %s20, 1
        %s420 = smul.addr %s419, 8
        %s421 = scalar_lea.vmem %s0, %s420
        %p422 = pneg %p41
        %p423 = pneg %p38
        %s424 = sand.u32 %s54, 1
        %s425 = sand.u32 %s54, 1
        %s426 = smul.addr %s425, 32
        %s427 = scalar_lea.vmem [#allocation2], %s426
        %p428 = pneg %p67
        %p429 = pneg %p64
        %s430 = sand.u32 %s80, 1
        %s431 = sand.u32 %s80, 1
        %s432 = smul.addr %s431, 32
        %s433 = scalar_lea.vmem [#allocation3], %s432
        %p434 = pneg %p93
        %p435 = pneg %p90
        %p436 = pneg %p114
        %p437 = pneg %p111
        %p438 = pneg %p135
        %p439 = pneg %p132
        %p440 = pneg %p156
        %p441 = pneg %p153
        %p442 = pneg %p177
        %p443 = pneg %p174
        %p444 = pneg %p198
        %p445 = pneg %p195
        %p446 = pneg %p219
        %p447 = pneg %p216
        %p448 = pneg %p245
        %p449 = pneg %p242
        %p450 = scmp.lt.s32.totalorder %s20, 1
        %s451 = scalar_select %p450, %s20, 1
        %s452 = scalar_lea.vmem %s9, %s451
        %p453 = scmp.lt.s32.totalorder %s20, 1
        %s454 = scalar_select %p453, %s20, 1
        %s455 = smul.addr %s454, 8
        %s456 = scalar_lea.vmem %s0, %s455
        %p457 = scmp.lt.s32.totalorder %s20, 1
        %s458 = scalar_select %p457, %s20, 1
        %s459 = scalar_lea.vmem %s9, %s458
        %v460 = vld [vmem:[%s3] sm:$0xff]
        %v461 = vld [vmem:[%s3 + $0x8] sm:$0xff]
        %v462 = vld [vmem:[%s3 + $0x10] sm:$0xff]
        %v463 = vld [vmem:[%s3 + $0x18] sm:$0xff]
        %v464 = vld [vmem:[%s4] sm:$0xff]
        %v465 = vld [vmem:[%s4 + $0x8] sm:$0xff]
        %v466 = vld [vmem:[%s4 + $0x10] sm:$0xff]
        %v467 = vld [vmem:[%s4 + $0x18] sm:$0xff]
        %v468 = vld [vmem:[%s5] sm:$0xff]
        %v469 = vld [vmem:[%s5 + $0x8] sm:$0xff]
        %v470 = vld [vmem:[%s5 + $0x10] sm:$0xff]
        %v471 = vld [vmem:[%s5 + $0x18] sm:$0xff]
        %v472 = vld [vmem:[%s6] sm:$0xff]
        %v473 = vld [vmem:[%s6 + $0x8] sm:$0xff]
        %v474 = vld [vmem:[%s6 + $0x10] sm:$0xff]
        %v475 = vld [vmem:[%s6 + $0x18] sm:$0xff]
        %v476 = vld [vmem:[%s7] sm:$0xff]
        %v477 = vld [vmem:[%s8] sm:$0xff]
        %v478 = vld [vmem:[%s456] sm:$0xff]
        %v479 = vld [vmem:[%s407] sm:$0xff]
        %481 = vset.pattern.permute.xlu0 0
        %482 = vperm.xlu0 %481, %v464
        %v483 = vpop.permute.xlu0 %482
        %486 = vset.pattern.permute.xlu0 0
        %487 = vperm.xlu0 %486, %v465
        %v488 = vpop.permute.xlu0 %487
        %491 = vset.pattern.permute.xlu0 0
        %492 = vperm.xlu0 %491, %v466
        %v493 = vpop.permute.xlu0 %492
        %496 = vset.pattern.permute.xlu0 0
        %497 = vperm.xlu0 %496, %v467
        %v498 = vpop.permute.xlu0 %497
        %vm500 = vcmask 130048
        %v502 = vsel %vm500, %v460, 0
        %v505 = vsel %vm500, %v461, 0
        %v508 = vsel %vm500, %v462, 0
        %v511 = vsel %vm500, %v463, 0
        %513 = vmatprep.subr.mxu0 0.0
        %514 = vmatpush1.msra.mxu0 0.0
        %515 = vmatprep.subr.mxu0 0.0
        %516 = vmatpush1.msra.mxu0 0.0
        %517 = vmatprep.subr.mxu0 0.0
        %518 = vmatpush1.msra.mxu0 0.0
        %519 = vmatprep.subr.mxu0 0.0
        %520 = vmatpush1.msra.mxu0 0.0
        %521 = vmatprep.subr.mxu0 0.0
        %522 = vmatpush1.msra.mxu0 0.0
        %523 = vmatprep.subr.mxu0 0.0
        %524 = vmatpush1.msra.mxu0 0.0
        %525 = vmatprep.subr.mxu0 0.0
        %526 = vmatpush1.msra.mxu0 0.0
        %527 = vmatprep.subr.mxu0 0.0
        %528 = vmatpush1.msra.mxu0 0.0
        %529 = vmatprep.subr.mxu0 0.0
        %530 = vmatpush1.msra.mxu0 0.0
        %531 = vmatprep.subr.mxu0 0.0
        %532 = vmatpush1.msra.mxu0 0.0
        %533 = vmatprep.subr.mxu0 0.0
        %534 = vmatpush1.msra.mxu0 0.0
        %535 = vmatprep.subr.mxu0 0.0
        %536 = vmatpush1.msra.mxu0 0.0
        %537 = vmatprep.subr.mxu0 0.0
        %538 = vmatpush1.msra.mxu0 0.0
        %539 = vmatprep.subr.mxu0 0.0
        %540 = vmatpush1.msra.mxu0 0.0
        %541 = vmatprep.subr.mxu0 0.0
        %542 = vmatpush1.msra.mxu0 %v479
        %543 = vmatprep.subr.mxu0 0.0
        %544 = vmatpush1.msra.mxu0 %v478
        %545 = vmatprep.subr.mxu0 0.0
        %546 = vmatpush2.msra.mxu0 0.0
        %547 = vmatprep.subr.mxu0 0.0
        %548 = vmatpush2.msra.mxu0 0.0
        %549 = vmatprep.subr.mxu0 0.0
        %550 = vmatpush2.msra.mxu0 0.0
        %551 = vmatprep.subr.mxu0 0.0
        %552 = vmatpush2.msra.mxu0 0.0
        %553 = vmatprep.subr.mxu0 0.0
        %554 = vmatpush2.msra.mxu0 0.0
        %555 = vmatprep.subr.mxu0 0.0
        %556 = vmatpush2.msra.mxu0 0.0
        %557 = vmatprep.subr.mxu0 0.0
        %558 = vmatpush2.msra.mxu0 0.0
        %559 = vmatprep.subr.mxu0 0.0
        %560 = vmatpush2.msra.mxu0 0.0
        %561 = vmatprep.subr.mxu0 0.0
        %562 = vmatpush2.msra.mxu0 0.0
        %563 = vmatprep.subr.mxu0 0.0
        %564 = vmatpush2.msra.mxu0 0.0
        %565 = vmatprep.subr.mxu0 0.0
        %566 = vmatpush2.msra.mxu0 0.0
        %567 = vmatprep.subr.mxu0 0.0
        %568 = vmatpush2.msra.mxu0 0.0
        %569 = vmatprep.subr.mxu0 0.0
        %570 = vmatpush2.msra.mxu0 0.0
        %571 = vmatprep.subr.mxu0 0.0
        %572 = vmatpush2.msra.mxu0 0.0
        %573 = vmatprep.subr.mxu0 0.0
        %574 = vmatpush2.msra.mxu0 0.0
        %575 = vmatprep.subr.mxu0 0.0
        %576 = vmatpush2.msra.mxu0 0.0
        %577 = vmatprep.mubr.f32.mxu0 0.0
        %578 = vmatmul.mubr.f32.gmra.mxu0 %v502
        %v579 = vpop.f32.mrf.mxu0
        %v580 = vadd.f32 %v483, %v579
        %v581 = vpop.f32.mrf.mxu0
        %582 = vmatprep.mubr.f32.mxu0 0.0
        %583 = vmatmul.mubr.f32.gmra.mxu0 %v505
        %v584 = vpop.f32.mrf.mxu0
        %v585 = vadd.f32 %v488, %v584
        %v586 = vpop.f32.mrf.mxu0
        %587 = vmatprep.mubr.f32.mxu0 0.0
        %588 = vmatmul.mubr.f32.gmra.mxu0 %v508
        %v589 = vpop.f32.mrf.mxu0
        %v590 = vadd.f32 %v493, %v589
        %v591 = vpop.f32.mrf.mxu0
        %592 = vmatprep.mubr.f32.mxu0 0.0
        %593 = vmatmul.mubr.f32.gmra.mxu0 %v511
        %v594 = vpop.f32.mrf.mxu0
        %v595 = vadd.f32 %v498, %v594
        %v596 = vpop.f32.mrf.mxu0
        %597 = vdwg.mxu0
        %v598 = vmax.f32 %v580, 0.0
        %v599 = vmax.f32 %v585, 0.0
        %v600 = vmax.f32 %v590, 0.0
        %v601 = vmax.f32 %v595, 0.0
        %603 = vset.pattern.permute.xlu0 0
        %604 = vperm.xlu0 %603, %v472
        %v605 = vpop.permute.xlu0 %604
        %608 = vset.pattern.permute.xlu0 0
        %609 = vperm.xlu0 %608, %v473
        %v610 = vpop.permute.xlu0 %609
        %613 = vset.pattern.permute.xlu0 0
        %614 = vperm.xlu0 %613, %v474
        %v615 = vpop.permute.xlu0 %614
        %618 = vset.pattern.permute.xlu0 0
        %619 = vperm.xlu0 %618, %v475
        %v620 = vpop.permute.xlu0 %619
        %vm622 = vcmask 261120
        %v624 = vsel %vm622, %v468, 0
        %v627 = vsel %vm622, %v469, 0
        %v630 = vsel %vm622, %v470, 0
        %v633 = vsel %vm622, %v471, 0
        %635 = vmatprep.subr.mxu0 0.0
        %636 = vmatpush1.msra.mxu0 0.0
        %637 = vmatprep.subr.mxu0 0.0
        %638 = vmatpush1.msra.mxu0 0.0
        %639 = vmatprep.subr.mxu0 0.0
        %640 = vmatpush1.msra.mxu0 0.0
        %641 = vmatprep.subr.mxu0 0.0
        %642 = vmatpush1.msra.mxu0 0.0
        %643 = vmatprep.subr.mxu0 0.0
        %644 = vmatpush1.msra.mxu0 0.0
        %645 = vmatprep.subr.mxu0 0.0
        %646 = vmatpush1.msra.mxu0 0.0
        %647 = vmatprep.subr.mxu0 0.0
        %648 = vmatpush1.msra.mxu0 0.0
        %649 = vmatprep.subr.mxu0 0.0
        %650 = vmatpush1.msra.mxu0 0.0
        %651 = vmatprep.subr.mxu0 0.0
        %652 = vmatpush1.msra.mxu0 0.0
        %653 = vmatprep.subr.mxu0 0.0
        %654 = vmatpush1.msra.mxu0 0.0
        %655 = vmatprep.subr.mxu0 0.0
        %656 = vmatpush1.msra.mxu0 0.0
        %657 = vmatprep.subr.mxu0 0.0
        %658 = vmatpush1.msra.mxu0 0.0
        %659 = vmatprep.subr.mxu0 0.0
        %660 = vmatpush1.msra.mxu0 %v601
        %661 = vmatprep.subr.mxu0 0.0
        %662 = vmatpush1.msra.mxu0 %v600
        %663 = vmatprep.subr.mxu0 0.0
        %664 = vmatpush1.msra.mxu0 %v599
        %665 = vmatprep.subr.mxu0 0.0
        %666 = vmatpush1.msra.mxu0 %v598
        %667 = vmatprep.subr.mxu0 0.0
        %668 = vmatpush2.msra.mxu0 0.0
        %669 = vmatprep.subr.mxu0 0.0
        %670 = vmatpush2.msra.mxu0 0.0
        %671 = vmatprep.subr.mxu0 0.0
        %672 = vmatpush2.msra.mxu0 0.0
        %673 = vmatprep.subr.mxu0 0.0
        %674 = vmatpush2.msra.mxu0 0.0
        %675 = vmatprep.subr.mxu0 0.0
        %676 = vmatpush2.msra.mxu0 0.0
        %677 = vmatprep.subr.mxu0 0.0
        %678 = vmatpush2.msra.mxu0 0.0
        %679 = vmatprep.subr.mxu0 0.0
        %680 = vmatpush2.msra.mxu0 0.0
        %681 = vmatprep.subr.mxu0 0.0
        %682 = vmatpush2.msra.mxu0 0.0
        %683 = vmatprep.subr.mxu0 0.0
        %684 = vmatpush2.msra.mxu0 0.0
        %685 = vmatprep.subr.mxu0 0.0
        %686 = vmatpush2.msra.mxu0 0.0
        %687 = vmatprep.subr.mxu0 0.0
        %688 = vmatpush2.msra.mxu0 0.0
        %689 = vmatprep.subr.mxu0 0.0
        %690 = vmatpush2.msra.mxu0 0.0
        %691 = vmatprep.subr.mxu0 0.0
        %692 = vmatpush2.msra.mxu0 0.0
        %693 = vmatprep.subr.mxu0 0.0
        %694 = vmatpush2.msra.mxu0 0.0
        %695 = vmatprep.subr.mxu0 0.0
        %696 = vmatpush2.msra.mxu0 0.0
        %697 = vmatprep.subr.mxu0 0.0
        %698 = vmatpush2.msra.mxu0 0.0
        %699 = vmatprep.mubr.f32.mxu0 0.0
        %700 = vmatmul.mubr.f32.gmra.mxu0 %v624
        %v701 = vpop.f32.mrf.mxu0
        %v702 = vadd.f32 %v605, %v701
        %v703 = vpop.f32.mrf.mxu0
        %704 = vmatprep.mubr.f32.mxu0 0.0
        %705 = vmatmul.mubr.f32.gmra.mxu0 %v627
        %v706 = vpop.f32.mrf.mxu0
        %v707 = vadd.f32 %v610, %v706
        %v708 = vpop.f32.mrf.mxu0
        %709 = vmatprep.mubr.f32.mxu0 0.0
        %710 = vmatmul.mubr.f32.gmra.mxu0 %v630
        %v711 = vpop.f32.mrf.mxu0
        %v712 = vadd.f32 %v615, %v711
        %v713 = vpop.f32.mrf.mxu0
        %714 = vmatprep.mubr.f32.mxu0 0.0
        %715 = vmatmul.mubr.f32.gmra.mxu0 %v633
        %v716 = vpop.f32.mrf.mxu0
        %v717 = vadd.f32 %v620, %v716
        %v718 = vpop.f32.mrf.mxu0
        %719 = vdwg.mxu0
        %v720 = vmax.f32 %v702, 0.0
        %v721 = vmax.f32 %v707, 0.0
        %v722 = vmax.f32 %v712, 0.0
        %v723 = vmax.f32 %v717, 0.0
        %725 = vset.pattern.permute.xlu0 0
        %726 = vperm.xlu0 %725, %v477
        %v727 = vpop.permute.xlu0 %726
        %v730 = vsel %vm622, %v476, 0
        %732 = vmatprep.subr.mxu0 0.0
        %733 = vmatpush1.msra.mxu0 0.0
        %734 = vmatprep.subr.mxu0 0.0
        %735 = vmatpush1.msra.mxu0 0.0
        %736 = vmatprep.subr.mxu0 0.0
        %737 = vmatpush1.msra.mxu0 0.0
        %738 = vmatprep.subr.mxu0 0.0
        %739 = vmatpush1.msra.mxu0 0.0
        %740 = vmatprep.subr.mxu0 0.0
        %741 = vmatpush1.msra.mxu0 0.0
        %742 = vmatprep.subr.mxu0 0.0
        %743 = vmatpush1.msra.mxu0 0.0
        %744 = vmatprep.subr.mxu0 0.0
        %745 = vmatpush1.msra.mxu0 0.0
        %746 = vmatprep.subr.mxu0 0.0
        %747 = vmatpush1.msra.mxu0 0.0
        %748 = vmatprep.subr.mxu0 0.0
        %749 = vmatpush1.msra.mxu0 0.0
        %750 = vmatprep.subr.mxu0 0.0
        %751 = vmatpush1.msra.mxu0 0.0
        %752 = vmatprep.subr.mxu0 0.0
        %753 = vmatpush1.msra.mxu0 0.0
        %754 = vmatprep.subr.mxu0 0.0
        %755 = vmatpush1.msra.mxu0 0.0
        %756 = vmatprep.subr.mxu0 0.0
        %757 = vmatpush1.msra.mxu0 %v723
        %758 = vmatprep.subr.mxu0 0.0
        %759 = vmatpush1.msra.mxu0 %v722
        %760 = vmatprep.subr.mxu0 0.0
        %761 = vmatpush1.msra.mxu0 %v721
        %762 = vmatprep.subr.mxu0 0.0
        %763 = vmatpush1.msra.mxu0 %v720
        %764 = vmatprep.subr.mxu0 0.0
        %765 = vmatpush2.msra.mxu0 0.0
        %766 = vmatprep.subr.mxu0 0.0
        %767 = vmatpush2.msra.mxu0 0.0
        %768 = vmatprep.subr.mxu0 0.0
        %769 = vmatpush2.msra.mxu0 0.0
        %770 = vmatprep.subr.mxu0 0.0
        %771 = vmatpush2.msra.mxu0 0.0
        %772 = vmatprep.subr.mxu0 0.0
        %773 = vmatpush2.msra.mxu0 0.0
        %774 = vmatprep.subr.mxu0 0.0
        %775 = vmatpush2.msra.mxu0 0.0
        %776 = vmatprep.subr.mxu0 0.0
        %777 = vmatpush2.msra.mxu0 0.0
        %778 = vmatprep.subr.mxu0 0.0
        %779 = vmatpush2.msra.mxu0 0.0
        %780 = vmatprep.subr.mxu0 0.0
        %781 = vmatpush2.msra.mxu0 0.0
        %782 = vmatprep.subr.mxu0 0.0
        %783 = vmatpush2.msra.mxu0 0.0
        %784 = vmatprep.subr.mxu0 0.0
        %785 = vmatpush2.msra.mxu0 0.0
        %786 = vmatprep.subr.mxu0 0.0
        %787 = vmatpush2.msra.mxu0 0.0
        %788 = vmatprep.subr.mxu0 0.0
        %789 = vmatpush2.msra.mxu0 0.0
        %790 = vmatprep.subr.mxu0 0.0
        %791 = vmatpush2.msra.mxu0 0.0
        %792 = vmatprep.subr.mxu0 0.0
        %793 = vmatpush2.msra.mxu0 0.0
        %794 = vmatprep.subr.mxu0 0.0
        %795 = vmatpush2.msra.mxu0 0.0
        %796 = vmatprep.mubr.f32.mxu0 0.0
        %797 = vmatmul.mubr.f32.gmra.mxu0 %v730
        %v798 = vpop.f32.mrf.mxu0
        %v799 = vadd.f32 %v727, %v798
        %v800 = vpop.f32.mrf.mxu0
        %801 = vdwg.mxu0
        %v802 = vld [vmem:[%s414] sm:$0xff]
        %v803 = vsub.f32 %v799, %v802
        %v804 = vmul.f32 %v803, %v803
        %v805 = vadd.f32 %v804, 0.0
        %s806 = scalar_lea.vmem %s407, 8 [#allocation2]
        %v807 = vld [vmem:[%s806] sm:$0xff]
        %808 = vmatprep.subr.mxu0 0.0
        %809 = vmatpush1.msra.mxu0 0.0
        %810 = vmatprep.subr.mxu0 0.0
        %811 = vmatpush1.msra.mxu0 0.0
        %812 = vmatprep.subr.mxu0 0.0
        %813 = vmatpush1.msra.mxu0 0.0
        %814 = vmatprep.subr.mxu0 0.0
        %815 = vmatpush1.msra.mxu0 0.0
        %816 = vmatprep.subr.mxu0 0.0
        %817 = vmatpush1.msra.mxu0 0.0
        %818 = vmatprep.subr.mxu0 0.0
        %819 = vmatpush1.msra.mxu0 0.0
        %820 = vmatprep.subr.mxu0 0.0
        %821 = vmatpush1.msra.mxu0 0.0
        %822 = vmatprep.subr.mxu0 0.0
        %823 = vmatpush1.msra.mxu0 0.0
        %824 = vmatprep.subr.mxu0 0.0
        %825 = vmatpush1.msra.mxu0 0.0
        %826 = vmatprep.subr.mxu0 0.0
        %827 = vmatpush1.msra.mxu0 0.0
        %828 = vmatprep.subr.mxu0 0.0
        %829 = vmatpush1.msra.mxu0 0.0
        %830 = vmatprep.subr.mxu0 0.0
        %831 = vmatpush1.msra.mxu0 0.0
        %832 = vmatprep.subr.mxu0 0.0
        %833 = vmatpush1.msra.mxu0 0.0
        %834 = vmatprep.subr.mxu0 0.0
        %835 = vmatpush1.msra.mxu0 0.0
        %836 = vmatprep.subr.mxu0 0.0
        %837 = vmatpush1.msra.mxu0 %v807
        %838 = vmatprep.subr.mxu0 0.0
        %839 = vmatpush1.msra.mxu0 %v799
        %840 = vmatprep.subr.mxu0 0.0
        %841 = vmatpush2.msra.mxu0 0.0
        %842 = vmatprep.subr.mxu0 0.0
        %843 = vmatpush2.msra.mxu0 0.0
        %844 = vmatprep.subr.mxu0 0.0
        %845 = vmatpush2.msra.mxu0 0.0
        %846 = vmatprep.subr.mxu0 0.0
        %847 = vmatpush2.msra.mxu0 0.0
        %848 = vmatprep.subr.mxu0 0.0
        %849 = vmatpush2.msra.mxu0 0.0
        %850 = vmatprep.subr.mxu0 0.0
        %851 = vmatpush2.msra.mxu0 0.0
        %852 = vmatprep.subr.mxu0 0.0
        %853 = vmatpush2.msra.mxu0 0.0
        %854 = vmatprep.subr.mxu0 0.0
        %855 = vmatpush2.msra.mxu0 0.0
        %856 = vmatprep.subr.mxu0 0.0
        %857 = vmatpush2.msra.mxu0 0.0
        %858 = vmatprep.subr.mxu0 0.0
        %859 = vmatpush2.msra.mxu0 0.0
        %860 = vmatprep.subr.mxu0 0.0
        %861 = vmatpush2.msra.mxu0 0.0
        %862 = vmatprep.subr.mxu0 0.0
        %863 = vmatpush2.msra.mxu0 0.0
        %864 = vmatprep.subr.mxu0 0.0
        %865 = vmatpush2.msra.mxu0 0.0
        %866 = vmatprep.subr.mxu0 0.0
        %867 = vmatpush2.msra.mxu0 0.0
        %868 = vmatprep.subr.mxu0 0.0
        %869 = vmatpush2.msra.mxu0 0.0
        %870 = vmatprep.subr.mxu0 0.0
        %871 = vmatpush2.msra.mxu0 0.0
        %872 = vmatprep.mubr.f32.mxu0 0.0
        %873 = vmatmul.mubr.f32.gmra.mxu0 %v502
        %v874 = vpop.f32.mrf.mxu0
        %v875 = vadd.f32 %v483, %v874
        %v876 = vpop.f32.mrf.mxu0
        %877 = vmatprep.mubr.f32.mxu0 0.0
        %878 = vmatmul.mubr.f32.gmra.mxu0 %v505
        %v879 = vpop.f32.mrf.mxu0
        %v880 = vadd.f32 %v488, %v879
        %v881 = vpop.f32.mrf.mxu0
        %882 = vmatprep.mubr.f32.mxu0 0.0
        %883 = vmatmul.mubr.f32.gmra.mxu0 %v508
        %v884 = vpop.f32.mrf.mxu0
        %v885 = vadd.f32 %v493, %v884
        %v886 = vpop.f32.mrf.mxu0
        %887 = vmatprep.mubr.f32.mxu0 0.0
        %888 = vmatmul.mubr.f32.gmra.mxu0 %v511
        %v889 = vpop.f32.mrf.mxu0
        %v890 = vadd.f32 %v498, %v889
        %v891 = vpop.f32.mrf.mxu0
        %892 = vdwg.mxu0
        %v893 = vmax.f32 %v875, 0.0
        %v894 = vmax.f32 %v880, 0.0
        %v895 = vmax.f32 %v885, 0.0
        %v896 = vmax.f32 %v890, 0.0
        %897 = vmatprep.subr.mxu0 0.0
        %898 = vmatpush1.msra.mxu0 0.0
        %899 = vmatprep.subr.mxu0 0.0
        %900 = vmatpush1.msra.mxu0 0.0
        %901 = vmatprep.subr.mxu0 0.0
        %902 = vmatpush1.msra.mxu0 0.0
        %903 = vmatprep.subr.mxu0 0.0
        %904 = vmatpush1.msra.mxu0 0.0
        %905 = vmatprep.subr.mxu0 0.0
        %906 = vmatpush1.msra.mxu0 0.0
        %907 = vmatprep.subr.mxu0 0.0
        %908 = vmatpush1.msra.mxu0 0.0
        %909 = vmatprep.subr.mxu0 0.0
        %910 = vmatpush1.msra.mxu0 0.0
        %911 = vmatprep.subr.mxu0 0.0
        %912 = vmatpush1.msra.mxu0 0.0
        %913 = vmatprep.subr.mxu0 0.0
        %914 = vmatpush1.msra.mxu0 0.0
        %915 = vmatprep.subr.mxu0 0.0
        %916 = vmatpush1.msra.mxu0 0.0
        %917 = vmatprep.subr.mxu0 0.0
        %918 = vmatpush1.msra.mxu0 0.0
        %919 = vmatprep.subr.mxu0 0.0
        %920 = vmatpush1.msra.mxu0 0.0
        %921 = vmatprep.subr.mxu0 0.0
        %922 = vmatpush1.msra.mxu0 %v896
        %923 = vmatprep.subr.mxu0 0.0
        %924 = vmatpush1.msra.mxu0 %v895
        %925 = vmatprep.subr.mxu0 0.0
        %926 = vmatpush1.msra.mxu0 %v894
        %927 = vmatprep.subr.mxu0 0.0
        %928 = vmatpush1.msra.mxu0 %v893
        %929 = vmatprep.subr.mxu0 0.0
        %930 = vmatpush2.msra.mxu0 0.0
        %931 = vmatprep.subr.mxu0 0.0
        %932 = vmatpush2.msra.mxu0 0.0
        %933 = vmatprep.subr.mxu0 0.0
        %934 = vmatpush2.msra.mxu0 0.0
        %935 = vmatprep.subr.mxu0 0.0
        %936 = vmatpush2.msra.mxu0 0.0
        %937 = vmatprep.subr.mxu0 0.0
        %938 = vmatpush2.msra.mxu0 0.0
        %939 = vmatprep.subr.mxu0 0.0
        %940 = vmatpush2.msra.mxu0 0.0
        %941 = vmatprep.subr.mxu0 0.0
        %942 = vmatpush2.msra.mxu0 0.0
        %943 = vmatprep.subr.mxu0 0.0
        %944 = vmatpush2.msra.mxu0 0.0
        %945 = vmatprep.subr.mxu0 0.0
        %946 = vmatpush2.msra.mxu0 0.0
        %947 = vmatprep.subr.mxu0 0.0
        %948 = vmatpush2.msra.mxu0 0.0
        %949 = vmatprep.subr.mxu0 0.0
        %950 = vmatpush2.msra.mxu0 0.0
        %951 = vmatprep.subr.mxu0 0.0
        %952 = vmatpush2.msra.mxu0 0.0
        %953 = vmatprep.subr.mxu0 0.0
        %954 = vmatpush2.msra.mxu0 0.0
        %955 = vmatprep.subr.mxu0 0.0
        %956 = vmatpush2.msra.mxu0 0.0
        %957 = vmatprep.subr.mxu0 0.0
        %958 = vmatpush2.msra.mxu0 0.0
        %959 = vmatprep.subr.mxu0 0.0
        %960 = vmatpush2.msra.mxu0 0.0
        %961 = vmatprep.mubr.f32.mxu0 0.0
        %962 = vmatmul.mubr.f32.gmra.mxu0 %v624
        %v963 = vpop.f32.mrf.mxu0
        %v964 = vadd.f32 %v605, %v963
        %v965 = vpop.f32.mrf.mxu0
        %966 = vmatprep.mubr.f32.mxu0 0.0
        %967 = vmatmul.mubr.f32.gmra.mxu0 %v627
        %v968 = vpop.f32.mrf.mxu0
        %v969 = vadd.f32 %v610, %v968
        %v970 = vpop.f32.mrf.mxu0
        %971 = vmatprep.mubr.f32.mxu0 0.0
        %972 = vmatmul.mubr.f32.gmra.mxu0 %v630
        %v973 = vpop.f32.mrf.mxu0
        %v974 = vadd.f32 %v615, %v973
        %v975 = vpop.f32.mrf.mxu0
        %976 = vmatprep.mubr.f32.mxu0 0.0
        %977 = vmatmul.mubr.f32.gmra.mxu0 %v633
        %v978 = vpop.f32.mrf.mxu0
        %v979 = vadd.f32 %v620, %v978
        %v980 = vpop.f32.mrf.mxu0
        %981 = vdwg.mxu0
        %v982 = vmax.f32 %v964, 0.0
        %v983 = vmax.f32 %v969, 0.0
        %v984 = vmax.f32 %v974, 0.0
        %v985 = vmax.f32 %v979, 0.0
        %986 = vmatprep.subr.mxu0 0.0
        %987 = vmatpush1.msra.mxu0 0.0
        %988 = vmatprep.subr.mxu0 0.0
        %989 = vmatpush1.msra.mxu0 0.0
        %990 = vmatprep.subr.mxu0 0.0
        %991 = vmatpush1.msra.mxu0 0.0
        %992 = vmatprep.subr.mxu0 0.0
        %993 = vmatpush1.msra.mxu0 0.0
        %994 = vmatprep.subr.mxu0 0.0
        %995 = vmatpush1.msra.mxu0 0.0
        %996 = vmatprep.subr.mxu0 0.0
        %997 = vmatpush1.msra.mxu0 0.0
        %998 = vmatprep.subr.mxu0 0.0
        %999 = vmatpush1.msra.mxu0 0.0
        %1000 = vmatprep.subr.mxu0 0.0
        %1001 = vmatpush1.msra.mxu0 0.0
        %1002 = vmatprep.subr.mxu0 0.0
        %1003 = vmatpush1.msra.mxu0 0.0
        %1004 = vmatprep.subr.mxu0 0.0
        %1005 = vmatpush1.msra.mxu0 0.0
        %1006 = vmatprep.subr.mxu0 0.0
        %1007 = vmatpush1.msra.mxu0 0.0
        %1008 = vmatprep.subr.mxu0 0.0
        %1009 = vmatpush1.msra.mxu0 0.0
        %1010 = vmatprep.subr.mxu0 0.0
        %1011 = vmatpush1.msra.mxu0 %v985
        %1012 = vmatprep.subr.mxu0 0.0
        %1013 = vmatpush1.msra.mxu0 %v984
        %1014 = vmatprep.subr.mxu0 0.0
        %1015 = vmatpush1.msra.mxu0 %v983
        %1016 = vmatprep.subr.mxu0 0.0
        %1017 = vmatpush1.msra.mxu0 %v982
        %1018 = vmatprep.subr.mxu0 0.0
        %1019 = vmatpush2.msra.mxu0 0.0
        %1020 = vmatprep.subr.mxu0 0.0
        %1021 = vmatpush2.msra.mxu0 0.0
        %1022 = vmatprep.subr.mxu0 0.0
        %1023 = vmatpush2.msra.mxu0 0.0
        %1024 = vmatprep.subr.mxu0 0.0
        %1025 = vmatpush2.msra.mxu0 0.0
        %1026 = vmatprep.subr.mxu0 0.0
        %1027 = vmatpush2.msra.mxu0 0.0
        %1028 = vmatprep.subr.mxu0 0.0
        %1029 = vmatpush2.msra.mxu0 0.0
        %1030 = vmatprep.subr.mxu0 0.0
        %1031 = vmatpush2.msra.mxu0 0.0
        %1032 = vmatprep.subr.mxu0 0.0
        %1033 = vmatpush2.msra.mxu0 0.0
        %1034 = vmatprep.subr.mxu0 0.0
        %1035 = vmatpush2.msra.mxu0 0.0
        %1036 = vmatprep.subr.mxu0 0.0
        %1037 = vmatpush2.msra.mxu0 0.0
        %1038 = vmatprep.subr.mxu0 0.0
        %1039 = vmatpush2.msra.mxu0 0.0
        %1040 = vmatprep.subr.mxu0 0.0
        %1041 = vmatpush2.msra.mxu0 0.0
        %1042 = vmatprep.subr.mxu0 0.0
        %1043 = vmatpush2.msra.mxu0 0.0
        %1044 = vmatprep.subr.mxu0 0.0
        %1045 = vmatpush2.msra.mxu0 0.0
        %1046 = vmatprep.subr.mxu0 0.0
        %1047 = vmatpush2.msra.mxu0 0.0
        %1048 = vmatprep.subr.mxu0 0.0
        %1049 = vmatpush2.msra.mxu0 0.0
        %1050 = vmatprep.mubr.f32.mxu0 0.0
        %1051 = vmatmul.mubr.f32.gmra.mxu0 %v730
        %v1052 = vpop.f32.mrf.mxu0
        %v1053 = vadd.f32 %v727, %v1052
        %v1054 = vpop.f32.mrf.mxu0
        %1055 = vdwg.mxu0
        %s1056 = scalar_lea.vmem %s414, 8 [#allocation3]
        %v1057 = vld [vmem:[%s1056] sm:$0xff]
        %v1058 = vsub.f32 %v1053, %v1057
        %v1059 = vmul.f32 %v1058, %v1058
        %v1060 = vmul.f32 %v1059, 0.99
        %v1061 = vadd.f32 %v805, %v1060
        %s1062 = scalar_lea.vmem %s407, 16 [#allocation2]
        %v1063 = vld [vmem:[%s1062] sm:$0xff]
        %1064 = vmatprep.subr.mxu0 0.0
        %1065 = vmatpush1.msra.mxu0 0.0
        %1066 = vmatprep.subr.mxu0 0.0
        %1067 = vmatpush1.msra.mxu0 0.0
        %1068 = vmatprep.subr.mxu0 0.0
        %1069 = vmatpush1.msra.mxu0 0.0
        %1070 = vmatprep.subr.mxu0 0.0
        %1071 = vmatpush1.msra.mxu0 0.0
        %1072 = vmatprep.subr.mxu0 0.0
        %1073 = vmatpush1.msra.mxu0 0.0
        %1074 = vmatprep.subr.mxu0 0.0
        %1075 = vmatpush1.msra.mxu0 0.0
        %1076 = vmatprep.subr.mxu0 0.0
        %1077 = vmatpush1.msra.mxu0 0.0
        %1078 = vmatprep.subr.mxu0 0.0
        %1079 = vmatpush1.msra.mxu0 0.0
        %1080 = vmatprep.subr.mxu0 0.0
        %1081 = vmatpush1.msra.mxu0 0.0
        %1082 = vmatprep.subr.mxu0 0.0
        %1083 = vmatpush1.msra.mxu0 0.0
        %1084 = vmatprep.subr.mxu0 0.0
        %1085 = vmatpush1.msra.mxu0 0.0
        %1086 = vmatprep.subr.mxu0 0.0
        %1087 = vmatpush1.msra.mxu0 0.0
        %1088 = vmatprep.subr.mxu0 0.0
        %1089 = vmatpush1.msra.mxu0 0.0
        %1090 = vmatprep.subr.mxu0 0.0
        %1091 = vmatpush1.msra.mxu0 0.0
        %1092 = vmatprep.subr.mxu0 0.0
        %1093 = vmatpush1.msra.mxu0 %v1063
        %1094 = vmatprep.subr.mxu0 0.0
        %1095 = vmatpush1.msra.mxu0 %v1053
        %1096 = vmatprep.subr.mxu0 0.0
        %1097 = vmatpush2.msra.mxu0 0.0
        %1098 = vmatprep.subr.mxu0 0.0
        %1099 = vmatpush2.msra.mxu0 0.0
        %1100 = vmatprep.subr.mxu0 0.0
        %1101 = vmatpush2.msra.mxu0 0.0
        %1102 = vmatprep.subr.mxu0 0.0
        %1103 = vmatpush2.msra.mxu0 0.0
        %1104 = vmatprep.subr.mxu0 0.0
        %1105 = vmatpush2.msra.mxu0 0.0
        %1106 = vmatprep.subr.mxu0 0.0
        %1107 = vmatpush2.msra.mxu0 0.0
        %1108 = vmatprep.subr.mxu0 0.0
        %1109 = vmatpush2.msra.mxu0 0.0
        %1110 = vmatprep.subr.mxu0 0.0
        %1111 = vmatpush2.msra.mxu0 0.0
        %1112 = vmatprep.subr.mxu0 0.0
        %1113 = vmatpush2.msra.mxu0 0.0
        %1114 = vmatprep.subr.mxu0 0.0
        %1115 = vmatpush2.msra.mxu0 0.0
        %1116 = vmatprep.subr.mxu0 0.0
        %1117 = vmatpush2.msra.mxu0 0.0
        %1118 = vmatprep.subr.mxu0 0.0
        %1119 = vmatpush2.msra.mxu0 0.0
        %1120 = vmatprep.subr.mxu0 0.0
        %1121 = vmatpush2.msra.mxu0 0.0
        %1122 = vmatprep.subr.mxu0 0.0
        %1123 = vmatpush2.msra.mxu0 0.0
        %1124 = vmatprep.subr.mxu0 0.0
        %1125 = vmatpush2.msra.mxu0 0.0
        %1126 = vmatprep.subr.mxu0 0.0
        %1127 = vmatpush2.msra.mxu0 0.0
        %1128 = vmatprep.mubr.f32.mxu0 0.0
        %1129 = vmatmul.mubr.f32.gmra.mxu0 %v502
        %v1130 = vpop.f32.mrf.mxu0
        %v1131 = vadd.f32 %v483, %v1130
        %v1132 = vpop.f32.mrf.mxu0
        %1133 = vmatprep.mubr.f32.mxu0 0.0
        %1134 = vmatmul.mubr.f32.gmra.mxu0 %v505
        %v1135 = vpop.f32.mrf.mxu0
        %v1136 = vadd.f32 %v488, %v1135
        %v1137 = vpop.f32.mrf.mxu0
        %1138 = vmatprep.mubr.f32.mxu0 0.0
        %1139 = vmatmul.mubr.f32.gmra.mxu0 %v508
        %v1140 = vpop.f32.mrf.mxu0
        %v1141 = vadd.f32 %v493, %v1140
        %v1142 = vpop.f32.mrf.mxu0
        %1143 = vmatprep.mubr.f32.mxu0 0.0
        %1144 = vmatmul.mubr.f32.gmra.mxu0 %v511
        %v1145 = vpop.f32.mrf.mxu0
        %v1146 = vadd.f32 %v498, %v1145
        %v1147 = vpop.f32.mrf.mxu0
        %1148 = vdwg.mxu0
        %v1149 = vmax.f32 %v1131, 0.0
        %v1150 = vmax.f32 %v1136, 0.0
        %v1151 = vmax.f32 %v1141, 0.0
        %v1152 = vmax.f32 %v1146, 0.0
        %1153 = vmatprep.subr.mxu0 0.0
        %1154 = vmatpush1.msra.mxu0 0.0
        %1155 = vmatprep.subr.mxu0 0.0
        %1156 = vmatpush1.msra.mxu0 0.0
        %1157 = vmatprep.subr.mxu0 0.0
        %1158 = vmatpush1.msra.mxu0 0.0
        %1159 = vmatprep.subr.mxu0 0.0
        %1160 = vmatpush1.msra.mxu0 0.0
        %1161 = vmatprep.subr.mxu0 0.0
        %1162 = vmatpush1.msra.mxu0 0.0
        %1163 = vmatprep.subr.mxu0 0.0
        %1164 = vmatpush1.msra.mxu0 0.0
        %1165 = vmatprep.subr.mxu0 0.0
        %1166 = vmatpush1.msra.mxu0 0.0
        %1167 = vmatprep.subr.mxu0 0.0
        %1168 = vmatpush1.msra.mxu0 0.0
        %1169 = vmatprep.subr.mxu0 0.0
        %1170 = vmatpush1.msra.mxu0 0.0
        %1171 = vmatprep.subr.mxu0 0.0
        %1172 = vmatpush1.msra.mxu0 0.0
        %1173 = vmatprep.subr.mxu0 0.0
        %1174 = vmatpush1.msra.mxu0 0.0
        %1175 = vmatprep.subr.mxu0 0.0
        %1176 = vmatpush1.msra.mxu0 0.0
        %1177 = vmatprep.subr.mxu0 0.0
        %1178 = vmatpush1.msra.mxu0 %v1152
        %1179 = vmatprep.subr.mxu0 0.0
        %1180 = vmatpush1.msra.mxu0 %v1151
        %1181 = vmatprep.subr.mxu0 0.0
        %1182 = vmatpush1.msra.mxu0 %v1150
        %1183 = vmatprep.subr.mxu0 0.0
        %1184 = vmatpush1.msra.mxu0 %v1149
        %1185 = vmatprep.subr.mxu0 0.0
        %1186 = vmatpush2.msra.mxu0 0.0
        %1187 = vmatprep.subr.mxu0 0.0
        %1188 = vmatpush2.msra.mxu0 0.0
        %1189 = vmatprep.subr.mxu0 0.0
        %1190 = vmatpush2.msra.mxu0 0.0
        %1191 = vmatprep.subr.mxu0 0.0
        %1192 = vmatpush2.msra.mxu0 0.0
        %1193 = vmatprep.subr.mxu0 0.0
        %1194 = vmatpush2.msra.mxu0 0.0
        %1195 = vmatprep.subr.mxu0 0.0
        %1196 = vmatpush2.msra.mxu0 0.0
        %1197 = vmatprep.subr.mxu0 0.0
        %1198 = vmatpush2.msra.mxu0 0.0
        %1199 = vmatprep.subr.mxu0 0.0
        %1200 = vmatpush2.msra.mxu0 0.0
        %1201 = vmatprep.subr.mxu0 0.0
        %1202 = vmatpush2.msra.mxu0 0.0
        %1203 = vmatprep.subr.mxu0 0.0
        %1204 = vmatpush2.msra.mxu0 0.0
        %1205 = vmatprep.subr.mxu0 0.0
        %1206 = vmatpush2.msra.mxu0 0.0
        %1207 = vmatprep.subr.mxu0 0.0
        %1208 = vmatpush2.msra.mxu0 0.0
        %1209 = vmatprep.subr.mxu0 0.0
        %1210 = vmatpush2.msra.mxu0 0.0
        %1211 = vmatprep.subr.mxu0 0.0
        %1212 = vmatpush2.msra.mxu0 0.0
        %1213 = vmatprep.subr.mxu0 0.0
        %1214 = vmatpush2.msra.mxu0 0.0
        %1215 = vmatprep.subr.mxu0 0.0
        %1216 = vmatpush2.msra.mxu0 0.0
        %1217 = vmatprep.mubr.f32.mxu0 0.0
        %1218 = vmatmul.mubr.f32.gmra.mxu0 %v624
        %v1219 = vpop.f32.mrf.mxu0
        %v1220 = vadd.f32 %v605, %v1219
        %v1221 = vpop.f32.mrf.mxu0
        %1222 = vmatprep.mubr.f32.mxu0 0.0
        %1223 = vmatmul.mubr.f32.gmra.mxu0 %v627
        %v1224 = vpop.f32.mrf.mxu0
        %v1225 = vadd.f32 %v610, %v1224
        %v1226 = vpop.f32.mrf.mxu0
        %1227 = vmatprep.mubr.f32.mxu0 0.0
        %1228 = vmatmul.mubr.f32.gmra.mxu0 %v630
        %v1229 = vpop.f32.mrf.mxu0
        %v1230 = vadd.f32 %v615, %v1229
        %v1231 = vpop.f32.mrf.mxu0
        %1232 = vmatprep.mubr.f32.mxu0 0.0
        %1233 = vmatmul.mubr.f32.gmra.mxu0 %v633
        %v1234 = vpop.f32.mrf.mxu0
        %v1235 = vadd.f32 %v620, %v1234
        %v1236 = vpop.f32.mrf.mxu0
        %1237 = vdwg.mxu0
        %v1238 = vmax.f32 %v1220, 0.0
        %v1239 = vmax.f32 %v1225, 0.0
        %v1240 = vmax.f32 %v1230, 0.0
        %v1241 = vmax.f32 %v1235, 0.0
        %1242 = vmatprep.subr.mxu0 0.0
        %1243 = vmatpush1.msra.mxu0 0.0
        %1244 = vmatprep.subr.mxu0 0.0
        %1245 = vmatpush1.msra.mxu0 0.0
        %1246 = vmatprep.subr.mxu0 0.0
        %1247 = vmatpush1.msra.mxu0 0.0
        %1248 = vmatprep.subr.mxu0 0.0
        %1249 = vmatpush1.msra.mxu0 0.0
        %1250 = vmatprep.subr.mxu0 0.0
        %1251 = vmatpush1.msra.mxu0 0.0
        %1252 = vmatprep.subr.mxu0 0.0
        %1253 = vmatpush1.msra.mxu0 0.0
        %1254 = vmatprep.subr.mxu0 0.0
        %1255 = vmatpush1.msra.mxu0 0.0
        %1256 = vmatprep.subr.mxu0 0.0
        %1257 = vmatpush1.msra.mxu0 0.0
        %1258 = vmatprep.subr.mxu0 0.0
        %1259 = vmatpush1.msra.mxu0 0.0
        %1260 = vmatprep.subr.mxu0 0.0
        %1261 = vmatpush1.msra.mxu0 0.0
        %1262 = vmatprep.subr.mxu0 0.0
        %1263 = vmatpush1.msra.mxu0 0.0
        %1264 = vmatprep.subr.mxu0 0.0
        %1265 = vmatpush1.msra.mxu0 0.0
        %1266 = vmatprep.subr.mxu0 0.0
        %1267 = vmatpush1.msra.mxu0 %v1241
        %1268 = vmatprep.subr.mxu0 0.0
        %1269 = vmatpush1.msra.mxu0 %v1240
        %1270 = vmatprep.subr.mxu0 0.0
        %1271 = vmatpush1.msra.mxu0 %v1239
        %1272 = vmatprep.subr.mxu0 0.0
        %1273 = vmatpush1.msra.mxu0 %v1238
        %1274 = vmatprep.subr.mxu0 0.0
        %1275 = vmatpush2.msra.mxu0 0.0
        %1276 = vmatprep.subr.mxu0 0.0
        %1277 = vmatpush2.msra.mxu0 0.0
        %1278 = vmatprep.subr.mxu0 0.0
        %1279 = vmatpush2.msra.mxu0 0.0
        %1280 = vmatprep.subr.mxu0 0.0
        %1281 = vmatpush2.msra.mxu0 0.0
        %1282 = vmatprep.subr.mxu0 0.0
        %1283 = vmatpush2.msra.mxu0 0.0
        %1284 = vmatprep.subr.mxu0 0.0
        %1285 = vmatpush2.msra.mxu0 0.0
        %1286 = vmatprep.subr.mxu0 0.0
        %1287 = vmatpush2.msra.mxu0 0.0
        %1288 = vmatprep.subr.mxu0 0.0
        %1289 = vmatpush2.msra.mxu0 0.0
        %1290 = vmatprep.subr.mxu0 0.0
        %1291 = vmatpush2.msra.mxu0 0.0
        %1292 = vmatprep.subr.mxu0 0.0
        %1293 = vmatpush2.msra.mxu0 0.0
        %1294 = vmatprep.subr.mxu0 0.0
        %1295 = vmatpush2.msra.mxu0 0.0
        %1296 = vmatprep.subr.mxu0 0.0
        %1297 = vmatpush2.msra.mxu0 0.0
        %1298 = vmatprep.subr.mxu0 0.0
        %1299 = vmatpush2.msra.mxu0 0.0
        %1300 = vmatprep.subr.mxu0 0.0
        %1301 = vmatpush2.msra.mxu0 0.0
        %1302 = vmatprep.subr.mxu0 0.0
        %1303 = vmatpush2.msra.mxu0 0.0
        %1304 = vmatprep.subr.mxu0 0.0
        %1305 = vmatpush2.msra.mxu0 0.0
        %1306 = vmatprep.mubr.f32.mxu0 0.0
        %1307 = vmatmul.mubr.f32.gmra.mxu0 %v730
        %v1308 = vpop.f32.mrf.mxu0
        %v1309 = vadd.f32 %v727, %v1308
        %v1310 = vpop.f32.mrf.mxu0
        %1311 = vdwg.mxu0
        %s1312 = scalar_lea.vmem %s414, 16 [#allocation3]
        %v1313 = vld [vmem:[%s1312] sm:$0xff]
        %v1314 = vsub.f32 %v1309, %v1313
        %v1315 = vmul.f32 %v1314, %v1314
        %v1316 = vmul.f32 %v1315, 0.9801
        %v1317 = vadd.f32 %v1061, %v1316
        %s1318 = scalar_lea.vmem %s407, 24 [#allocation2]
        %v1319 = vld [vmem:[%s1318] sm:$0xff]
        %1320 = vmatprep.subr.mxu0 0.0
        %1321 = vmatpush1.msra.mxu0 0.0
        %1322 = vmatprep.subr.mxu0 0.0
        %1323 = vmatpush1.msra.mxu0 0.0
        %1324 = vmatprep.subr.mxu0 0.0
        %1325 = vmatpush1.msra.mxu0 0.0
        %1326 = vmatprep.subr.mxu0 0.0
        %1327 = vmatpush1.msra.mxu0 0.0
        %1328 = vmatprep.subr.mxu0 0.0
        %1329 = vmatpush1.msra.mxu0 0.0
        %1330 = vmatprep.subr.mxu0 0.0
        %1331 = vmatpush1.msra.mxu0 0.0
        %1332 = vmatprep.subr.mxu0 0.0
        %1333 = vmatpush1.msra.mxu0 0.0
        %1334 = vmatprep.subr.mxu0 0.0
        %1335 = vmatpush1.msra.mxu0 0.0
        %1336 = vmatprep.subr.mxu0 0.0
        %1337 = vmatpush1.msra.mxu0 0.0
        %1338 = vmatprep.subr.mxu0 0.0
        %1339 = vmatpush1.msra.mxu0 0.0
        %1340 = vmatprep.subr.mxu0 0.0
        %1341 = vmatpush1.msra.mxu0 0.0
        %1342 = vmatprep.subr.mxu0 0.0
        %1343 = vmatpush1.msra.mxu0 0.0
        %1344 = vmatprep.subr.mxu0 0.0
        %1345 = vmatpush1.msra.mxu0 0.0
        %1346 = vmatprep.subr.mxu0 0.0
        %1347 = vmatpush1.msra.mxu0 0.0
        %1348 = vmatprep.subr.mxu0 0.0
        %1349 = vmatpush1.msra.mxu0 %v1319
        %1350 = vmatprep.subr.mxu0 0.0
        %1351 = vmatpush1.msra.mxu0 %v1309
        %1352 = vmatprep.subr.mxu0 0.0
        %1353 = vmatpush2.msra.mxu0 0.0
        %1354 = vmatprep.subr.mxu0 0.0
        %1355 = vmatpush2.msra.mxu0 0.0
        %1356 = vmatprep.subr.mxu0 0.0
        %1357 = vmatpush2.msra.mxu0 0.0
        %1358 = vmatprep.subr.mxu0 0.0
        %1359 = vmatpush2.msra.mxu0 0.0
        %1360 = vmatprep.subr.mxu0 0.0
        %1361 = vmatpush2.msra.mxu0 0.0
        %1362 = vmatprep.subr.mxu0 0.0
        %1363 = vmatpush2.msra.mxu0 0.0
        %1364 = vmatprep.subr.mxu0 0.0
        %1365 = vmatpush2.msra.mxu0 0.0
        %1366 = vmatprep.subr.mxu0 0.0
        %1367 = vmatpush2.msra.mxu0 0.0
        %1368 = vmatprep.subr.mxu0 0.0
        %1369 = vmatpush2.msra.mxu0 0.0
        %1370 = vmatprep.subr.mxu0 0.0
        %1371 = vmatpush2.msra.mxu0 0.0
        %1372 = vmatprep.subr.mxu0 0.0
        %1373 = vmatpush2.msra.mxu0 0.0
        %1374 = vmatprep.subr.mxu0 0.0
        %1375 = vmatpush2.msra.mxu0 0.0
        %1376 = vmatprep.subr.mxu0 0.0
        %1377 = vmatpush2.msra.mxu0 0.0
        %1378 = vmatprep.subr.mxu0 0.0
        %1379 = vmatpush2.msra.mxu0 0.0
        %1380 = vmatprep.subr.mxu0 0.0
        %1381 = vmatpush2.msra.mxu0 0.0
        %1382 = vmatprep.subr.mxu0 0.0
        %1383 = vmatpush2.msra.mxu0 0.0
        %1384 = vmatprep.mubr.f32.mxu0 0.0
        %1385 = vmatmul.mubr.f32.gmra.mxu0 %v502
        %v1386 = vpop.f32.mrf.mxu0
        %v1387 = vadd.f32 %v483, %v1386
        %v1388 = vpop.f32.mrf.mxu0
        %1389 = vmatprep.mubr.f32.mxu0 0.0
        %1390 = vmatmul.mubr.f32.gmra.mxu0 %v505
        %v1391 = vpop.f32.mrf.mxu0
        %v1392 = vadd.f32 %v488, %v1391
        %v1393 = vpop.f32.mrf.mxu0
        %1394 = vmatprep.mubr.f32.mxu0 0.0
        %1395 = vmatmul.mubr.f32.gmra.mxu0 %v508
        %v1396 = vpop.f32.mrf.mxu0
        %v1397 = vadd.f32 %v493, %v1396
        %v1398 = vpop.f32.mrf.mxu0
        %1399 = vmatprep.mubr.f32.mxu0 0.0
        %1400 = vmatmul.mubr.f32.gmra.mxu0 %v511
        %v1401 = vpop.f32.mrf.mxu0
        %v1402 = vadd.f32 %v498, %v1401
        %v1403 = vpop.f32.mrf.mxu0
        %1404 = vdwg.mxu0
        %v1405 = vmax.f32 %v1387, 0.0
        %v1406 = vmax.f32 %v1392, 0.0
        %v1407 = vmax.f32 %v1397, 0.0
        %v1408 = vmax.f32 %v1402, 0.0
        %1409 = vmatprep.subr.mxu0 0.0
        %1410 = vmatpush1.msra.mxu0 0.0
        %1411 = vmatprep.subr.mxu0 0.0
        %1412 = vmatpush1.msra.mxu0 0.0
        %1413 = vmatprep.subr.mxu0 0.0
        %1414 = vmatpush1.msra.mxu0 0.0
        %1415 = vmatprep.subr.mxu0 0.0
        %1416 = vmatpush1.msra.mxu0 0.0
        %1417 = vmatprep.subr.mxu0 0.0
        %1418 = vmatpush1.msra.mxu0 0.0
        %1419 = vmatprep.subr.mxu0 0.0
        %1420 = vmatpush1.msra.mxu0 0.0
        %1421 = vmatprep.subr.mxu0 0.0
        %1422 = vmatpush1.msra.mxu0 0.0
        %1423 = vmatprep.subr.mxu0 0.0
        %1424 = vmatpush1.msra.mxu0 0.0
        %1425 = vmatprep.subr.mxu0 0.0
        %1426 = vmatpush1.msra.mxu0 0.0
        %1427 = vmatprep.subr.mxu0 0.0
        %1428 = vmatpush1.msra.mxu0 0.0
        %1429 = vmatprep.subr.mxu0 0.0
        %1430 = vmatpush1.msra.mxu0 0.0
        %1431 = vmatprep.subr.mxu0 0.0
        %1432 = vmatpush1.msra.mxu0 0.0
        %1433 = vmatprep.subr.mxu0 0.0
        %1434 = vmatpush1.msra.mxu0 %v1408
        %1435 = vmatprep.subr.mxu0 0.0
        %1436 = vmatpush1.msra.mxu0 %v1407
        %1437 = vmatprep.subr.mxu0 0.0
        %1438 = vmatpush1.msra.mxu0 %v1406
        %1439 = vmatprep.subr.mxu0 0.0
        %1440 = vmatpush1.msra.mxu0 %v1405
        %1441 = vmatprep.subr.mxu0 0.0
        %1442 = vmatpush2.msra.mxu0 0.0
        %1443 = vmatprep.subr.mxu0 0.0
        %1444 = vmatpush2.msra.mxu0 0.0
        %1445 = vmatprep.subr.mxu0 0.0
        %1446 = vmatpush2.msra.mxu0 0.0
        %1447 = vmatprep.subr.mxu0 0.0
        %1448 = vmatpush2.msra.mxu0 0.0
        %1449 = vmatprep.subr.mxu0 0.0
        %1450 = vmatpush2.msra.mxu0 0.0
        %1451 = vmatprep.subr.mxu0 0.0
        %1452 = vmatpush2.msra.mxu0 0.0
        %1453 = vmatprep.subr.mxu0 0.0
        %1454 = vmatpush2.msra.mxu0 0.0
        %1455 = vmatprep.subr.mxu0 0.0
        %1456 = vmatpush2.msra.mxu0 0.0
        %1457 = vmatprep.subr.mxu0 0.0
        %1458 = vmatpush2.msra.mxu0 0.0
        %1459 = vmatprep.subr.mxu0 0.0
        %1460 = vmatpush2.msra.mxu0 0.0
        %1461 = vmatprep.subr.mxu0 0.0
        %1462 = vmatpush2.msra.mxu0 0.0
        %1463 = vmatprep.subr.mxu0 0.0
        %1464 = vmatpush2.msra.mxu0 0.0
        %1465 = vmatprep.subr.mxu0 0.0
        %1466 = vmatpush2.msra.mxu0 0.0
        %1467 = vmatprep.subr.mxu0 0.0
        %1468 = vmatpush2.msra.mxu0 0.0
        %1469 = vmatprep.subr.mxu0 0.0
        %1470 = vmatpush2.msra.mxu0 0.0
        %1471 = vmatprep.subr.mxu0 0.0
        %1472 = vmatpush2.msra.mxu0 0.0
        %1473 = vmatprep.mubr.f32.mxu0 0.0
        %1474 = vmatmul.mubr.f32.gmra.mxu0 %v624
        %v1475 = vpop.f32.mrf.mxu0
        %v1476 = vadd.f32 %v605, %v1475
        %v1477 = vpop.f32.mrf.mxu0
        %1478 = vmatprep.mubr.f32.mxu0 0.0
        %1479 = vmatmul.mubr.f32.gmra.mxu0 %v627
        %v1480 = vpop.f32.mrf.mxu0
        %v1481 = vadd.f32 %v610, %v1480
        %v1482 = vpop.f32.mrf.mxu0
        %1483 = vmatprep.mubr.f32.mxu0 0.0
        %1484 = vmatmul.mubr.f32.gmra.mxu0 %v630
        %v1485 = vpop.f32.mrf.mxu0
        %v1486 = vadd.f32 %v615, %v1485
        %v1487 = vpop.f32.mrf.mxu0
        %1488 = vmatprep.mubr.f32.mxu0 0.0
        %1489 = vmatmul.mubr.f32.gmra.mxu0 %v633
        %v1490 = vpop.f32.mrf.mxu0
        %v1491 = vadd.f32 %v620, %v1490
        %v1492 = vpop.f32.mrf.mxu0
        %1493 = vdwg.mxu0
        %v1494 = vmax.f32 %v1476, 0.0
        %v1495 = vmax.f32 %v1481, 0.0
        %v1496 = vmax.f32 %v1486, 0.0
        %v1497 = vmax.f32 %v1491, 0.0
        %1498 = vmatprep.subr.mxu0 0.0
        %1499 = vmatpush1.msra.mxu0 0.0
        %1500 = vmatprep.subr.mxu0 0.0
        %1501 = vmatpush1.msra.mxu0 0.0
        %1502 = vmatprep.subr.mxu0 0.0
        %1503 = vmatpush1.msra.mxu0 0.0
        %1504 = vmatprep.subr.mxu0 0.0
        %1505 = vmatpush1.msra.mxu0 0.0
        %1506 = vmatprep.subr.mxu0 0.0
        %1507 = vmatpush1.msra.mxu0 0.0
        %1508 = vmatprep.subr.mxu0 0.0
        %1509 = vmatpush1.msra.mxu0 0.0
        %1510 = vmatprep.subr.mxu0 0.0
        %1511 = vmatpush1.msra.mxu0 0.0
        %1512 = vmatprep.subr.mxu0 0.0
        %1513 = vmatpush1.msra.mxu0 0.0
        %1514 = vmatprep.subr.mxu0 0.0
        %1515 = vmatpush1.msra.mxu0 0.0
        %1516 = vmatprep.subr.mxu0 0.0
        %1517 = vmatpush1.msra.mxu0 0.0
        %1518 = vmatprep.subr.mxu0 0.0
        %1519 = vmatpush1.msra.mxu0 0.0
        %1520 = vmatprep.subr.mxu0 0.0
        %1521 = vmatpush1.msra.mxu0 0.0
        %1522 = vmatprep.subr.mxu0 0.0
        %1523 = vmatpush1.msra.mxu0 %v1497
        %1524 = vmatprep.subr.mxu0 0.0
        %1525 = vmatpush1.msra.mxu0 %v1496
        %1526 = vmatprep.subr.mxu0 0.0
        %1527 = vmatpush1.msra.mxu0 %v1495
        %1528 = vmatprep.subr.mxu0 0.0
        %1529 = vmatpush1.msra.mxu0 %v1494
        %1530 = vmatprep.subr.mxu0 0.0
        %1531 = vmatpush2.msra.mxu0 0.0
        %1532 = vmatprep.subr.mxu0 0.0
        %1533 = vmatpush2.msra.mxu0 0.0
        %1534 = vmatprep.subr.mxu0 0.0
        %1535 = vmatpush2.msra.mxu0 0.0
        %1536 = vmatprep.subr.mxu0 0.0
        %1537 = vmatpush2.msra.mxu0 0.0
        %1538 = vmatprep.subr.mxu0 0.0
        %1539 = vmatpush2.msra.mxu0 0.0
        %1540 = vmatprep.subr.mxu0 0.0
        %1541 = vmatpush2.msra.mxu0 0.0
        %1542 = vmatprep.subr.mxu0 0.0
        %1543 = vmatpush2.msra.mxu0 0.0
        %1544 = vmatprep.subr.mxu0 0.0
        %1545 = vmatpush2.msra.mxu0 0.0
        %1546 = vmatprep.subr.mxu0 0.0
        %1547 = vmatpush2.msra.mxu0 0.0
        %1548 = vmatprep.subr.mxu0 0.0
        %1549 = vmatpush2.msra.mxu0 0.0
        %1550 = vmatprep.subr.mxu0 0.0
        %1551 = vmatpush2.msra.mxu0 0.0
        %1552 = vmatprep.subr.mxu0 0.0
        %1553 = vmatpush2.msra.mxu0 0.0
        %1554 = vmatprep.subr.mxu0 0.0
        %1555 = vmatpush2.msra.mxu0 0.0
        %1556 = vmatprep.subr.mxu0 0.0
        %1557 = vmatpush2.msra.mxu0 0.0
        %1558 = vmatprep.subr.mxu0 0.0
        %1559 = vmatpush2.msra.mxu0 0.0
        %1560 = vmatprep.subr.mxu0 0.0
        %1561 = vmatpush2.msra.mxu0 0.0
        %1562 = vmatprep.mubr.f32.mxu0 0.0
        %1563 = vmatmul.mubr.f32.gmra.mxu0 %v730
        %v1564 = vpop.f32.mrf.mxu0
        %v1565 = vadd.f32 %v727, %v1564
        %v1566 = vpop.f32.mrf.mxu0
        %1567 = vdwg.mxu0
        %s1568 = scalar_lea.vmem %s414, 24 [#allocation3]
        %v1569 = vld [vmem:[%s1568] sm:$0xff]
        %v1570 = vsub.f32 %v1565, %v1569
        %v1571 = vmul.f32 %v1570, %v1570
        %v1572 = vmul.f32 %v1571, 0.970299
        %v1573 = vadd.f32 %v1317, %v1572
        %v1574 = vrot.slane %v1573, 4
        %v1575 = vadd.f32 %v1573, %v1574
        %v1576 = vrot.slane %v1575, 2
        %v1577 = vadd.f32 %v1575, %v1576
        %v1578 = vrot.slane %v1577, 1
        %v1579 = vadd.f32 %v1577, %v1578
        %1580 = vst [vmem:[%s459] sm:$0x1] %v1579
        %p1581 = scmp.lt.s32.totalorder %s20, 1
        %s1582 = scalar_select %p1581, %s20, 1
        %s1583 = scalar_lea.vmem %s9, %s1582
        // Predicated region
        $region133: #{_multi_step_loss_impl.1} parent=123 // pred_check
          %p1584 = pneg %p242
        $region134: #{_multi_step_loss_impl.1} parent=123 // pred_check_branch
          %1586 = sbr.rel (%p1584) target = $region136
        $region135: #{_multi_step_loss_impl.1} parent=123 // pred_region
          _
        $region136: #{_multi_step_loss_impl.1} parent=123 // pred_fallthru
          _
      $region124: #{_multi_step_loss_impl.1} parent=5 // pred_fallthru
        _
      %p1587 = scmp.le.s32.totalorder 2, %s15
      // Predicated region
      $region137: #{_multi_step_loss_impl.1} parent=5 // pred_check
        %p1588 = pneg %p1587
      $region138: #{_multi_step_loss_impl.1} parent=5 // pred_check_branch
        %1590 = sbr.rel (%p1588) target = $region140
      $region139: #{_multi_step_loss_impl.1} parent=5 // pred_region
        %s1591 = ssub.s32 %s15, 2
        // Predicated region
        $region141: #{_multi_step_loss_impl.1} parent=139 // pred_check
          %p1592 = pneg %p248
        $region142: #{_multi_step_loss_impl.1} parent=139 // pred_check_branch
          %1594 = sbr.rel (%p1592) target = $region144
        $region143: #{_multi_step_loss_impl.1} parent=139 // pred_region
          %p1595 = scmp.lt.s32.totalorder %s21, 1
          %s1596 = scalar_select %p1595, %s21, 1
          %s1597 = scalar_lea.vmem %s9, %s1596
        $region144: #{_multi_step_loss_impl.1} parent=139 // pred_fallthru
          _
      $region140: #{_multi_step_loss_impl.1} parent=5 // pred_fallthru
        _
    $region6: #{_multi_step_loss_impl.1} parent=1 // loop_footer
      %s19 = sadd.s32 1, %s15
    $region7: #{_multi_step_loss_impl.1} parent=1 // loop_footer_branch
      %14 = sbr.rel target = $region3
    $region8: #{_multi_step_loss_impl.1} parent=1 // loop_exit
      _

</llo_original>
